<compile_context>
chip_gen: v5e
topology: v5e:2x2
jax: 0.10.0
libtpu: 0.0.40
codegen_flags: <defaults>
</compile_context>

<pallas_src>
import numpy as np
import jax
import jax.numpy as jnp
from jax import lax
from jax.experimental import pallas as pl
from jax.experimental.pallas import tpu as pltpu


def _choose_block(n):
    """Pick (nb, n_pad): samples per grid step (multiple of the 8-row f32
    sublane tile) and the zero-padded batch size."""
    n8 = ((n + 7) // 8) * 8
    if n8 >= 512:
        nb = 256                        # ~1 MiB in + 1 MiB out per step @ C=4, S=256
    elif n8 >= 16:
        nb = ((n8 // 2 + 7) // 8) * 8   # >= 2 grid steps (v7x: 2 TensorCores)
    else:
        nb = n8                         # tiny batches: single step
    n_pad = ((n8 + nb - 1) // nb) * nb
    return nb, n_pad


def _make_kernel(c1, cm, c2, k, h, w, nb, chunk):
    p = k // 2
    s_len = h * w
    assert nb % chunk == 0 and chunk % 8 == 0
    num_chunks = nb // chunk
    # Flat spatial offsets of the k*k SAME-conv taps.
    offs = [(dy - p) * w + (dx - p) for dy in range(k) for dx in range(k)]

    def kernel(x_ref, w1_ref, b1_ref, w2_ref, b2_ref, w3_ref, b3_ref,
               m_ref, o_ref):
        # x_ref : (c1, nb, S) f32 channel-major block (spatial on lanes).
        # w*_ref / b*_ref : flat 1-D SMEM scalar tables (BN scale folded).
        # m_ref : (k*k, S) f32 edge masks for the SAME-padded taps.
        # o_ref : (c2, nb, S) f32.

        def process_chunk(c0):
            # ---- load one 8-sample chunk per input channel: (chunk, S) slabs
            x_rows = [x_ref[ci, pl.ds(c0, chunk), :] for ci in range(c1)]

            # ---- conv1: 1x1 (scale folded) + bias + ReLU : VPU scalar FMAs
            y1 = []
            for co in range(cm):
                acc = x_rows[0] * w1_ref[co]
                for ci in range(1, c1):
                    acc = acc + x_rows[ci] * w1_ref[ci * cm + co]
                y1.append(jnp.maximum(acc + b1_ref[co], 0.0))
            # Fuse channels into one tile-aligned slab so each conv2 tap needs
            # only ONE roll and ONE mask multiply (chunk % 8 == 0 -> free).
            y1_slab = jnp.concatenate(y1, axis=0)            # (cm*chunk, S)

            # ---- conv2: kxk SAME conv via lane rolls (XLU) + edge masks
            acc2 = [None] * cm
            for t, off in enumerate(offs):
                if off == 0:
                    slab = y1_slab                            # center tap, no mask
                else:
                    slab = pltpu.roll(y1_slab, shift=(-off) % s_len, axis=1)
                    slab = slab * m_ref[pl.ds(t, 1), :]       # (1,S) mask broadcast
                rows = [slab[ci * chunk:(ci + 1) * chunk, :]  # aligned static slices
                        for ci in range(cm)]
                for co in range(cm):
                    for ci in range(cm):
                        term = rows[ci] * w2_ref[(t * cm + ci) * cm + co]
                        acc2[co] = term if acc2[co] is None else acc2[co] + term
            y2 = [jnp.maximum(acc2[co] + b2_ref[co], 0.0) for co in range(cm)]

            # ---- conv3: 1x1 (scale folded, no act) + identity residual + ReLU
            # TODO(synk): resize_identity (identity_conv) and SE paths are not
            # implemented; disabled by config (c1==c2, stride==1, se_ratio=None).
            for co in range(c2):
                acc = y2[0] * w3_ref[co]
                for ci in range(1, cm):
                    acc = acc + y2[ci] * w3_ref[ci * c2 + co]
                o_ref[co, pl.ds(c0, chunk), :] = jnp.maximum(
                    acc + b3_ref[co] + x_rows[co], 0.0)       # full-vreg store

        if num_chunks == 1:
            process_chunk(0)
        else:
            def body(i, carry):
                process_chunk(pl.multiple_of(i * chunk, chunk))
                return carry
            lax.fori_loop(0, num_chunks, body, 0)

    return kernel


def prepare_params(params, h, w, k=3):
    """Offline parameter prep: fold BN scale into conv weights, flatten the
    tiny weight tensors to 1-D (SMEM scalar tables) and precompute the k*k
    SAME-padding edge masks in the lane-dense (H*W) layout."""
    w1, s1, b1, w2, s2, b2, w3, s3, b3 = params
    w1f = jnp.asarray((w1 * s1.reshape(1, -1)).reshape(-1), jnp.float32)
    w2f = jnp.asarray((w2 * s2.reshape(1, 1, 1, -1)).reshape(-1), jnp.float32)
    w3f = jnp.asarray((w3 * s3.reshape(1, -1)).reshape(-1), jnp.float32)
    b1f = jnp.asarray(b1.reshape(-1), jnp.float32)
    b2f = jnp.asarray(b2.reshape(-1), jnp.float32)
    b3f = jnp.asarray(b3.reshape(-1), jnp.float32)

    p = k // 2
    hh = np.arange(h).reshape(h, 1)
    ww = np.arange(w).reshape(1, w)
    masks = np.zeros((k * k, h * w), np.float32)
    for dy in range(k):
        for dx in range(k):
            oy, ox = dy - p, dx - p
            valid = ((hh + oy >= 0) & (hh + oy < h) &
                     (ww + ox >= 0) & (ww + ox < w))
            masks[dy * k + dx] = valid.reshape(-1).astype(np.float32)
    return (w1f, b1f, w2f, b2f, w3f, b3f, jnp.asarray(masks))


def resnet_bottleneck_forward(x_nchw, prep):
    """x_nchw: (N, C1, H, W) float32 (PyTorch layout); prep: prepare_params()."""
    w1f, b1f, w2f, b2f, w3f, b3f, masks = prep
    n, c1, h, w = x_nchw.shape
    s_len = h * w
    cm = b1f.shape[0]
    c2 = b3f.shape[0]
    kk = masks.shape[0]
    k = int(round(kk ** 0.5))
    assert c1 == c2, "identity residual path requires c1 == c2 and stride == 1"

    nb, n_pad = _choose_block(n)
    chunk = 8                                   # f32 sublane tile

    # Channel-major relayout: (N,C,H,W) -> (C, N, H*W); pad batch to n_pad.
    x = jnp.transpose(x_nchw.reshape(n, c1, s_len), (1, 0, 2))
    if n_pad != n:
        x = jnp.pad(x, ((0, 0), (0, n_pad - n), (0, 0)))

    kernel = _make_kernel(c1, cm, c2, k, h, w, nb, chunk)
    smem = pl.BlockSpec(memory_space=pltpu.MemorySpace.SMEM)

    out = pl.pallas_call(
        kernel,
        out_shape=jax.ShapeDtypeStruct((c2, n_pad, s_len), x.dtype),
        grid=(n_pad // nb,),
        in_specs=[
            pl.BlockSpec((c1, nb, s_len), lambda i: (0, i, 0)),   # x block
            smem, smem,                                           # w1, b1
            smem, smem,                                           # w2, b2
            smem, smem,                                           # w3, b3
            pl.BlockSpec((kk, s_len), lambda i: (0, 0)),          # edge masks
        ],
        out_specs=pl.BlockSpec((c2, nb, s_len), lambda i: (0, i, 0)),
        compiler_params=pltpu.CompilerParams(
            dimension_semantics=("parallel",)),
    )(x, w1f, b1f, w2f, b2f, w3f, b3f, masks)

    out = out[:, :n, :]                          # drop batch padding
    return jnp.transpose(out, (1, 0, 2)).reshape(n, c2, h, w)


def init_params(key, c1=4, c2=4, e=1.0, k=3):
    """Deterministic synthetic weights. BN (gamma, beta, mean, var) expressed
    as per-channel (scale, bias)."""
    cm = int(round(e * c1))      # round_channels(e*c1, divisor=1)
    ks = jax.random.split(key, 15)
    eps = 1e-5

    def bn_fold(k0, k1, k2, k3, c):
        gamma = jax.random.uniform(k0, (c,), minval=0.5, maxval=1.5)
        beta = jax.random.normal(k1, (c,)) * 0.1
        mean = jax.random.normal(k2, (c,)) * 0.1
        var = jax.random.uniform(k3, (c,), minval=0.5, maxval=1.5)
        scale = gamma / jnp.sqrt(var + eps)
        bias = beta - mean * scale
        return (scale.reshape(1, c).astype(jnp.float32),
                bias.reshape(1, c).astype(jnp.float32))

    w1 = (jax.random.normal(ks[0], (c1, cm)) * 0.3).astype(jnp.float32)        # 1x1 (Cin, Cout)
    w2 = (jax.random.normal(ks[1], (k, k, cm, cm)) * 0.2).astype(jnp.float32)  # HWIO
    w3 = (jax.random.normal(ks[2], (cm, c2)) * 0.3).astype(jnp.float32)        # 1x1 (Cin, Cout)
    s1, b1 = bn_fold(ks[3], ks[4], ks[5], ks[6], cm)
    s2, b2 = bn_fold(ks[7], ks[8], ks[9], ks[10], cm)
    s3, b3 = bn_fold(ks[11], ks[12], ks[13], ks[14], c2)
    return (w1, s1, b1, w2, s2, b2, w3, s3, b3)


def ref_forward(x_nchw, params):
    """Pure-JAX reference of the PyTorch forward (inference-mode BN)."""
    w1, s1, b1, w2, s2, b2, w3, s3, b3 = params
    x = jnp.transpose(x_nchw, (0, 2, 3, 1))
    hp = lax.Precision.HIGHEST
    y1 = jax.nn.relu(jnp.einsum('nhwc,cd->nhwd', x, w1, precision=hp) * s1 + b1)
    y2 = lax.conv_general_dilated(
        y1, w2, window_strides=(1, 1), padding='SAME',
        dimension_numbers=('NHWC', 'HWIO', 'NHWC'), precision=hp)
    y2 = jax.nn.relu(y2 * s2 + b2)
    y3 = jnp.einsum('nhwc,cd->nhwd', y2, w3, precision=hp) * s3 + b3
    out = jax.nn.relu(y3 + x)                        # identity branch = x
    return jnp.transpose(out, (0, 3, 1, 2))


if __name__ == "__main__":
    key = jax.random.PRNGKey(0)
    kx, kp = jax.random.split(key)

    # PyTorch-style NCHW input: batch=2, c1=4, 16x16 spatial
    x = jax.random.normal(kx, (2, 4, 16, 16), dtype=jnp.float32)
    params = init_params(kp, c1=4, c2=4, e=1.0, k=3)
    prep = prepare_params(params, h=16, w=16, k=3)   # offline BN fold + masks

    out = resnet_bottleneck_forward(x, prep)
    out = jax.block_until_ready(out)

    ref = ref_forward(x, params)
    np.testing.assert_allclose(np.asarray(out), np.asarray(ref),
                               rtol=2e-3, atol=2e-3)
    print("KERNEL_OK")
</pallas_src>

<mosaic_0001>
module attributes {stable_mosaic.version = 11 : i64} {
  func.func @kernel(%arg0: i32, %arg1: memref<4x8x256xf32, #tpu.memory_space<vmem>>, %arg2: memref<16xf32, #tpu.memory_space<smem>>, %arg3: memref<4xf32, #tpu.memory_space<smem>>, %arg4: memref<144xf32, #tpu.memory_space<smem>>, %arg5: memref<4xf32, #tpu.memory_space<smem>>, %arg6: memref<16xf32, #tpu.memory_space<smem>>, %arg7: memref<4xf32, #tpu.memory_space<smem>>, %arg8: memref<9x256xf32, #tpu.memory_space<vmem>>, %arg9: memref<4x8x256xf32, #tpu.memory_space<vmem>>) attributes {dimension_semantics = [#tpu.dimension_semantics<parallel>], iteration_bounds = array<i64: 1>, scalar_prefetch = 0 : i64, scratch_operands = 0 : i64, tpu.core_type = #tpu.core_type<tc>, window_params = [{transform_indices = @transform_0, window_bounds = array<i64: 4, 8, 256>}, {transform_indices = @transform_1, window_bounds = array<i64: 16>}, {transform_indices = @transform_2, window_bounds = array<i64: 4>}, {transform_indices = @transform_3, window_bounds = array<i64: 144>}, {transform_indices = @transform_4, window_bounds = array<i64: 4>}, {transform_indices = @transform_5, window_bounds = array<i64: 16>}, {transform_indices = @transform_6, window_bounds = array<i64: 4>}, {pipeline_mode = #tpu.pipeline_mode<synchronous>, transform_indices = @transform_7, window_bounds = array<i64: 9, 256>}, {transform_indices = @transform_8, window_bounds = array<i64: 4, 8, 256>}]} {
    %c0 = arith.constant 0 : index
    %c0_0 = arith.constant 0 : index
    %c0_1 = arith.constant 0 : index
    %0 = vector.load %arg1[%c0, %c0_0, %c0_1] : memref<4x8x256xf32, #tpu.memory_space<vmem>>, vector<1x8x256xf32>
    %1 = vector.shape_cast %0 : vector<1x8x256xf32> to vector<8x256xf32>
    %c1 = arith.constant 1 : index
    %c0_2 = arith.constant 0 : index
    %c0_3 = arith.constant 0 : index
    %2 = vector.load %arg1[%c1, %c0_2, %c0_3] : memref<4x8x256xf32, #tpu.memory_space<vmem>>, vector<1x8x256xf32>
    %3 = vector.shape_cast %2 : vector<1x8x256xf32> to vector<8x256xf32>
    %c2 = arith.constant 2 : index
    %c0_4 = arith.constant 0 : index
    %c0_5 = arith.constant 0 : index
    %4 = vector.load %arg1[%c2, %c0_4, %c0_5] : memref<4x8x256xf32, #tpu.memory_space<vmem>>, vector<1x8x256xf32>
    %5 = vector.shape_cast %4 : vector<1x8x256xf32> to vector<8x256xf32>
    %c3 = arith.constant 3 : index
    %c0_6 = arith.constant 0 : index
    %c0_7 = arith.constant 0 : index
    %6 = vector.load %arg1[%c3, %c0_6, %c0_7] : memref<4x8x256xf32, #tpu.memory_space<vmem>>, vector<1x8x256xf32>
    %7 = vector.shape_cast %6 : vector<1x8x256xf32> to vector<8x256xf32>
    %c0_8 = arith.constant 0 : index
    %8 = memref.load %arg2[%c0_8] : memref<16xf32, #tpu.memory_space<smem>>
    %9 = vector.broadcast %8 : f32 to vector<8x256xf32>
    %10 = arith.mulf %1, %9 : vector<8x256xf32>
    %c4 = arith.constant 4 : index
    %11 = memref.load %arg2[%c4] : memref<16xf32, #tpu.memory_space<smem>>
    %12 = vector.broadcast %11 : f32 to vector<8x256xf32>
    %13 = arith.mulf %3, %12 : vector<8x256xf32>
    %14 = arith.addf %10, %13 : vector<8x256xf32>
    %c8 = arith.constant 8 : index
    %15 = memref.load %arg2[%c8] : memref<16xf32, #tpu.memory_space<smem>>
    %16 = vector.broadcast %15 : f32 to vector<8x256xf32>
    %17 = arith.mulf %5, %16 : vector<8x256xf32>
    %18 = arith.addf %14, %17 : vector<8x256xf32>
    %c12 = arith.constant 12 : index
    %19 = memref.load %arg2[%c12] : memref<16xf32, #tpu.memory_space<smem>>
    %20 = vector.broadcast %19 : f32 to vector<8x256xf32>
    %21 = arith.mulf %7, %20 : vector<8x256xf32>
    %22 = arith.addf %18, %21 : vector<8x256xf32>
    %c0_9 = arith.constant 0 : index
    %23 = memref.load %arg3[%c0_9] : memref<4xf32, #tpu.memory_space<smem>>
    %24 = vector.broadcast %23 : f32 to vector<8x256xf32>
    %25 = arith.addf %22, %24 : vector<8x256xf32>
    %cst = arith.constant 0.000000e+00 : f32
    %26 = vector.broadcast %cst : f32 to vector<8x256xf32>
    %27 = arith.maximumf %25, %26 : vector<8x256xf32>
    %c1_10 = arith.constant 1 : index
    %28 = memref.load %arg2[%c1_10] : memref<16xf32, #tpu.memory_space<smem>>
    %29 = vector.broadcast %28 : f32 to vector<8x256xf32>
    %30 = arith.mulf %1, %29 : vector<8x256xf32>
    %c5 = arith.constant 5 : index
    %31 = memref.load %arg2[%c5] : memref<16xf32, #tpu.memory_space<smem>>
    %32 = vector.broadcast %31 : f32 to vector<8x256xf32>
    %33 = arith.mulf %3, %32 : vector<8x256xf32>
    %34 = arith.addf %30, %33 : vector<8x256xf32>
    %c9 = arith.constant 9 : index
    %35 = memref.load %arg2[%c9] : memref<16xf32, #tpu.memory_space<smem>>
    %36 = vector.broadcast %35 : f32 to vector<8x256xf32>
    %37 = arith.mulf %5, %36 : vector<8x256xf32>
    %38 = arith.addf %34, %37 : vector<8x256xf32>
    %c13 = arith.constant 13 : index
    %39 = memref.load %arg2[%c13] : memref<16xf32, #tpu.memory_space<smem>>
    %40 = vector.broadcast %39 : f32 to vector<8x256xf32>
    %41 = arith.mulf %7, %40 : vector<8x256xf32>
    %42 = arith.addf %38, %41 : vector<8x256xf32>
    %c1_11 = arith.constant 1 : index
    %43 = memref.load %arg3[%c1_11] : memref<4xf32, #tpu.memory_space<smem>>
    %44 = vector.broadcast %43 : f32 to vector<8x256xf32>
    %45 = arith.addf %42, %44 : vector<8x256xf32>
    %cst_12 = arith.constant 0.000000e+00 : f32
    %46 = vector.broadcast %cst_12 : f32 to vector<8x256xf32>
    %47 = arith.maximumf %45, %46 : vector<8x256xf32>
    %c2_13 = arith.constant 2 : index
    %48 = memref.load %arg2[%c2_13] : memref<16xf32, #tpu.memory_space<smem>>
    %49 = vector.broadcast %48 : f32 to vector<8x256xf32>
    %50 = arith.mulf %1, %49 : vector<8x256xf32>
    %c6 = arith.constant 6 : index
    %51 = memref.load %arg2[%c6] : memref<16xf32, #tpu.memory_space<smem>>
    %52 = vector.broadcast %51 : f32 to vector<8x256xf32>
    %53 = arith.mulf %3, %52 : vector<8x256xf32>
    %54 = arith.addf %50, %53 : vector<8x256xf32>
    %c10 = arith.constant 10 : index
    %55 = memref.load %arg2[%c10] : memref<16xf32, #tpu.memory_space<smem>>
    %56 = vector.broadcast %55 : f32 to vector<8x256xf32>
    %57 = arith.mulf %5, %56 : vector<8x256xf32>
    %58 = arith.addf %54, %57 : vector<8x256xf32>
    %c14 = arith.constant 14 : index
    %59 = memref.load %arg2[%c14] : memref<16xf32, #tpu.memory_space<smem>>
    %60 = vector.broadcast %59 : f32 to vector<8x256xf32>
    %61 = arith.mulf %7, %60 : vector<8x256xf32>
    %62 = arith.addf %58, %61 : vector<8x256xf32>
    %c2_14 = arith.constant 2 : index
    %63 = memref.load %arg3[%c2_14] : memref<4xf32, #tpu.memory_space<smem>>
    %64 = vector.broadcast %63 : f32 to vector<8x256xf32>
    %65 = arith.addf %62, %64 : vector<8x256xf32>
    %cst_15 = arith.constant 0.000000e+00 : f32
    %66 = vector.broadcast %cst_15 : f32 to vector<8x256xf32>
    %67 = arith.maximumf %65, %66 : vector<8x256xf32>
    %c3_16 = arith.constant 3 : index
    %68 = memref.load %arg2[%c3_16] : memref<16xf32, #tpu.memory_space<smem>>
    %69 = vector.broadcast %68 : f32 to vector<8x256xf32>
    %70 = arith.mulf %1, %69 : vector<8x256xf32>
    %c7 = arith.constant 7 : index
    %71 = memref.load %arg2[%c7] : memref<16xf32, #tpu.memory_space<smem>>
    %72 = vector.broadcast %71 : f32 to vector<8x256xf32>
    %73 = arith.mulf %3, %72 : vector<8x256xf32>
    %74 = arith.addf %70, %73 : vector<8x256xf32>
    %c11 = arith.constant 11 : index
    %75 = memref.load %arg2[%c11] : memref<16xf32, #tpu.memory_space<smem>>
    %76 = vector.broadcast %75 : f32 to vector<8x256xf32>
    %77 = arith.mulf %5, %76 : vector<8x256xf32>
    %78 = arith.addf %74, %77 : vector<8x256xf32>
    %c15 = arith.constant 15 : index
    %79 = memref.load %arg2[%c15] : memref<16xf32, #tpu.memory_space<smem>>
    %80 = vector.broadcast %79 : f32 to vector<8x256xf32>
    %81 = arith.mulf %7, %80 : vector<8x256xf32>
    %82 = arith.addf %78, %81 : vector<8x256xf32>
    %c3_17 = arith.constant 3 : index
    %83 = memref.load %arg3[%c3_17] : memref<4xf32, #tpu.memory_space<smem>>
    %84 = vector.broadcast %83 : f32 to vector<8x256xf32>
    %85 = arith.addf %82, %84 : vector<8x256xf32>
    %cst_18 = arith.constant 0.000000e+00 : f32
    %86 = vector.broadcast %cst_18 : f32 to vector<8x256xf32>
    %87 = arith.maximumf %85, %86 : vector<8x256xf32>
    %88 = tpu.concatenate %27, %47, %67, %87 in 0 : vector<8x256xf32>, vector<8x256xf32>, vector<8x256xf32>, vector<8x256xf32> -> vector<32x256xf32>
    %c17_i32 = arith.constant 17 : i32
    %89 = tpu.dynamic_rotate %88 by %c17_i32 dim 1 : vector<32x256xf32>, i32 -> vector<32x256xf32>
    %c0_19 = arith.constant 0 : index
    %c0_20 = arith.constant 0 : index
    %90 = vector.load %arg8[%c0_19, %c0_20] : memref<9x256xf32, #tpu.memory_space<vmem>>, vector<1x256xf32>
    %91 = vector.broadcast %90 : vector<1x256xf32> to vector<32x256xf32>
    %92 = arith.mulf %89, %91 : vector<32x256xf32>
    %93 = vector.extract_strided_slice %92 {offsets = [0, 0], sizes = [8, 256], strides = [1, 1]} : vector<32x256xf32> to vector<8x256xf32>
    %94 = vector.extract_strided_slice %92 {offsets = [8, 0], sizes = [8, 256], strides = [1, 1]} : vector<32x256xf32> to vector<8x256xf32>
    %95 = vector.extract_strided_slice %92 {offsets = [16, 0], sizes = [8, 256], strides = [1, 1]} : vector<32x256xf32> to vector<8x256xf32>
    %96 = vector.extract_strided_slice %92 {offsets = [24, 0], sizes = [8, 256], strides = [1, 1]} : vector<32x256xf32> to vector<8x256xf32>
    %c0_21 = arith.constant 0 : index
    %97 = memref.load %arg4[%c0_21] : memref<144xf32, #tpu.memory_space<smem>>
    %98 = vector.broadcast %97 : f32 to vector<8x256xf32>
    %99 = arith.mulf %93, %98 : vector<8x256xf32>
    %c4_22 = arith.constant 4 : index
    %100 = memref.load %arg4[%c4_22] : memref<144xf32, #tpu.memory_space<smem>>
    %101 = vector.broadcast %100 : f32 to vector<8x256xf32>
    %102 = arith.mulf %94, %101 : vector<8x256xf32>
    %103 = arith.addf %99, %102 : vector<8x256xf32>
    %c8_23 = arith.constant 8 : index
    %104 = memref.load %arg4[%c8_23] : memref<144xf32, #tpu.memory_space<smem>>
    %105 = vector.broadcast %104 : f32 to vector<8x256xf32>
    %106 = arith.mulf %95, %105 : vector<8x256xf32>
    %107 = arith.addf %103, %106 : vector<8x256xf32>
    %c12_24 = arith.constant 12 : index
    %108 = memref.load %arg4[%c12_24] : memref<144xf32, #tpu.memory_space<smem>>
    %109 = vector.broadcast %108 : f32 to vector<8x256xf32>
    %110 = arith.mulf %96, %109 : vector<8x256xf32>
    %111 = arith.addf %107, %110 : vector<8x256xf32>
    %c1_25 = arith.constant 1 : index
    %112 = memref.load %arg4[%c1_25] : memref<144xf32, #tpu.memory_space<smem>>
    %113 = vector.broadcast %112 : f32 to vector<8x256xf32>
    %114 = arith.mulf %93, %113 : vector<8x256xf32>
    %c5_26 = arith.constant 5 : index
    %115 = memref.load %arg4[%c5_26] : memref<144xf32, #tpu.memory_space<smem>>
    %116 = vector.broadcast %115 : f32 to vector<8x256xf32>
    %117 = arith.mulf %94, %116 : vector<8x256xf32>
    %118 = arith.addf %114, %117 : vector<8x256xf32>
    %c9_27 = arith.constant 9 : index
    %119 = memref.load %arg4[%c9_27] : memref<144xf32, #tpu.memory_space<smem>>
    %120 = vector.broadcast %119 : f32 to vector<8x256xf32>
    %121 = arith.mulf %95, %120 : vector<8x256xf32>
    %122 = arith.addf %118, %121 : vector<8x256xf32>
    %c13_28 = arith.constant 13 : index
    %123 = memref.load %arg4[%c13_28] : memref<144xf32, #tpu.memory_space<smem>>
    %124 = vector.broadcast %123 : f32 to vector<8x256xf32>
    %125 = arith.mulf %96, %124 : vector<8x256xf32>
    %126 = arith.addf %122, %125 : vector<8x256xf32>
    %c2_29 = arith.constant 2 : index
    %127 = memref.load %arg4[%c2_29] : memref<144xf32, #tpu.memory_space<smem>>
    %128 = vector.broadcast %127 : f32 to vector<8x256xf32>
    %129 = arith.mulf %93, %128 : vector<8x256xf32>
    %c6_30 = arith.constant 6 : index
    %130 = memref.load %arg4[%c6_30] : memref<144xf32, #tpu.memory_space<smem>>
    %131 = vector.broadcast %130 : f32 to vector<8x256xf32>
    %132 = arith.mulf %94, %131 : vector<8x256xf32>
    %133 = arith.addf %129, %132 : vector<8x256xf32>
    %c10_31 = arith.constant 10 : index
    %134 = memref.load %arg4[%c10_31] : memref<144xf32, #tpu.memory_space<smem>>
    %135 = vector.broadcast %134 : f32 to vector<8x256xf32>
    %136 = arith.mulf %95, %135 : vector<8x256xf32>
    %137 = arith.addf %133, %136 : vector<8x256xf32>
    %c14_32 = arith.constant 14 : index
    %138 = memref.load %arg4[%c14_32] : memref<144xf32, #tpu.memory_space<smem>>
    %139 = vector.broadcast %138 : f32 to vector<8x256xf32>
    %140 = arith.mulf %96, %139 : vector<8x256xf32>
    %141 = arith.addf %137, %140 : vector<8x256xf32>
    %c3_33 = arith.constant 3 : index
    %142 = memref.load %arg4[%c3_33] : memref<144xf32, #tpu.memory_space<smem>>
    %143 = vector.broadcast %142 : f32 to vector<8x256xf32>
    %144 = arith.mulf %93, %143 : vector<8x256xf32>
    %c7_34 = arith.constant 7 : index
    %145 = memref.load %arg4[%c7_34] : memref<144xf32, #tpu.memory_space<smem>>
    %146 = vector.broadcast %145 : f32 to vector<8x256xf32>
    %147 = arith.mulf %94, %146 : vector<8x256xf32>
    %148 = arith.addf %144, %147 : vector<8x256xf32>
    %c11_35 = arith.constant 11 : index
    %149 = memref.load %arg4[%c11_35] : memref<144xf32, #tpu.memory_space<smem>>
    %150 = vector.broadcast %149 : f32 to vector<8x256xf32>
    %151 = arith.mulf %95, %150 : vector<8x256xf32>
    %152 = arith.addf %148, %151 : vector<8x256xf32>
    %c15_36 = arith.constant 15 : index
    %153 = memref.load %arg4[%c15_36] : memref<144xf32, #tpu.memory_space<smem>>
    %154 = vector.broadcast %153 : f32 to vector<8x256xf32>
    %155 = arith.mulf %96, %154 : vector<8x256xf32>
    %156 = arith.addf %152, %155 : vector<8x256xf32>
    %c16_i32 = arith.constant 16 : i32
    %157 = tpu.dynamic_rotate %88 by %c16_i32 dim 1 : vector<32x256xf32>, i32 -> vector<32x256xf32>
    %c1_37 = arith.constant 1 : index
    %c0_38 = arith.constant 0 : index
    %158 = vector.load %arg8[%c1_37, %c0_38] : memref<9x256xf32, #tpu.memory_space<vmem>>, vector<1x256xf32>
    %159 = vector.broadcast %158 : vector<1x256xf32> to vector<32x256xf32>
    %160 = arith.mulf %157, %159 : vector<32x256xf32>
    %161 = vector.extract_strided_slice %160 {offsets = [0, 0], sizes = [8, 256], strides = [1, 1]} : vector<32x256xf32> to vector<8x256xf32>
    %162 = vector.extract_strided_slice %160 {offsets = [8, 0], sizes = [8, 256], strides = [1, 1]} : vector<32x256xf32> to vector<8x256xf32>
    %163 = vector.extract_strided_slice %160 {offsets = [16, 0], sizes = [8, 256], strides = [1, 1]} : vector<32x256xf32> to vector<8x256xf32>
    %164 = vector.extract_strided_slice %160 {offsets = [24, 0], sizes = [8, 256], strides = [1, 1]} : vector<32x256xf32> to vector<8x256xf32>
    %c16 = arith.constant 16 : index
    %165 = memref.load %arg4[%c16] : memref<144xf32, #tpu.memory_space<smem>>
    %166 = vector.broadcast %165 : f32 to vector<8x256xf32>
    %167 = arith.mulf %161, %166 : vector<8x256xf32>
    %168 = arith.addf %111, %167 : vector<8x256xf32>
    %c20 = arith.constant 20 : index
    %169 = memref.load %arg4[%c20] : memref<144xf32, #tpu.memory_space<smem>>
    %170 = vector.broadcast %169 : f32 to vector<8x256xf32>
    %171 = arith.mulf %162, %170 : vector<8x256xf32>
    %172 = arith.addf %168, %171 : vector<8x256xf32>
    %c24 = arith.constant 24 : index
    %173 = memref.load %arg4[%c24] : memref<144xf32, #tpu.memory_space<smem>>
    %174 = vector.broadcast %173 : f32 to vector<8x256xf32>
    %175 = arith.mulf %163, %174 : vector<8x256xf32>
    %176 = arith.addf %172, %175 : vector<8x256xf32>
    %c28 = arith.constant 28 : index
    %177 = memref.load %arg4[%c28] : memref<144xf32, #tpu.memory_space<smem>>
    %178 = vector.broadcast %177 : f32 to vector<8x256xf32>
    %179 = arith.mulf %164, %178 : vector<8x256xf32>
    %180 = arith.addf %176, %179 : vector<8x256xf32>
    %c17 = arith.constant 17 : index
    %181 = memref.load %arg4[%c17] : memref<144xf32, #tpu.memory_space<smem>>
    %182 = vector.broadcast %181 : f32 to vector<8x256xf32>
    %183 = arith.mulf %161, %182 : vector<8x256xf32>
    %184 = arith.addf %126, %183 : vector<8x256xf32>
    %c21 = arith.constant 21 : index
    %185 = memref.load %arg4[%c21] : memref<144xf32, #tpu.memory_space<smem>>
    %186 = vector.broadcast %185 : f32 to vector<8x256xf32>
    %187 = arith.mulf %162, %186 : vector<8x256xf32>
    %188 = arith.addf %184, %187 : vector<8x256xf32>
    %c25 = arith.constant 25 : index
    %189 = memref.load %arg4[%c25] : memref<144xf32, #tpu.memory_space<smem>>
    %190 = vector.broadcast %189 : f32 to vector<8x256xf32>
    %191 = arith.mulf %163, %190 : vector<8x256xf32>
    %192 = arith.addf %188, %191 : vector<8x256xf32>
    %c29 = arith.constant 29 : index
    %193 = memref.load %arg4[%c29] : memref<144xf32, #tpu.memory_space<smem>>
    %194 = vector.broadcast %193 : f32 to vector<8x256xf32>
    %195 = arith.mulf %164, %194 : vector<8x256xf32>
    %196 = arith.addf %192, %195 : vector<8x256xf32>
    %c18 = arith.constant 18 : index
    %197 = memref.load %arg4[%c18] : memref<144xf32, #tpu.memory_space<smem>>
    %198 = vector.broadcast %197 : f32 to vector<8x256xf32>
    %199 = arith.mulf %161, %198 : vector<8x256xf32>
    %200 = arith.addf %141, %199 : vector<8x256xf32>
    %c22 = arith.constant 22 : index
    %201 = memref.load %arg4[%c22] : memref<144xf32, #tpu.memory_space<smem>>
    %202 = vector.broadcast %201 : f32 to vector<8x256xf32>
    %203 = arith.mulf %162, %202 : vector<8x256xf32>
    %204 = arith.addf %200, %203 : vector<8x256xf32>
    %c26 = arith.constant 26 : index
    %205 = memref.load %arg4[%c26] : memref<144xf32, #tpu.memory_space<smem>>
    %206 = vector.broadcast %205 : f32 to vector<8x256xf32>
    %207 = arith.mulf %163, %206 : vector<8x256xf32>
    %208 = arith.addf %204, %207 : vector<8x256xf32>
    %c30 = arith.constant 30 : index
    %209 = memref.load %arg4[%c30] : memref<144xf32, #tpu.memory_space<smem>>
    %210 = vector.broadcast %209 : f32 to vector<8x256xf32>
    %211 = arith.mulf %164, %210 : vector<8x256xf32>
    %212 = arith.addf %208, %211 : vector<8x256xf32>
    %c19 = arith.constant 19 : index
    %213 = memref.load %arg4[%c19] : memref<144xf32, #tpu.memory_space<smem>>
    %214 = vector.broadcast %213 : f32 to vector<8x256xf32>
    %215 = arith.mulf %161, %214 : vector<8x256xf32>
    %216 = arith.addf %156, %215 : vector<8x256xf32>
    %c23 = arith.constant 23 : index
    %217 = memref.load %arg4[%c23] : memref<144xf32, #tpu.memory_space<smem>>
    %218 = vector.broadcast %217 : f32 to vector<8x256xf32>
    %219 = arith.mulf %162, %218 : vector<8x256xf32>
    %220 = arith.addf %216, %219 : vector<8x256xf32>
    %c27 = arith.constant 27 : index
    %221 = memref.load %arg4[%c27] : memref<144xf32, #tpu.memory_space<smem>>
    %222 = vector.broadcast %221 : f32 to vector<8x256xf32>
    %223 = arith.mulf %163, %222 : vector<8x256xf32>
    %224 = arith.addf %220, %223 : vector<8x256xf32>
    %c31 = arith.constant 31 : index
    %225 = memref.load %arg4[%c31] : memref<144xf32, #tpu.memory_space<smem>>
    %226 = vector.broadcast %225 : f32 to vector<8x256xf32>
    %227 = arith.mulf %164, %226 : vector<8x256xf32>
    %228 = arith.addf %224, %227 : vector<8x256xf32>
    %c15_i32 = arith.constant 15 : i32
    %229 = tpu.dynamic_rotate %88 by %c15_i32 dim 1 : vector<32x256xf32>, i32 -> vector<32x256xf32>
    %c2_39 = arith.constant 2 : index
    %c0_40 = arith.constant 0 : index
    %230 = vector.load %arg8[%c2_39, %c0_40] : memref<9x256xf32, #tpu.memory_space<vmem>>, vector<1x256xf32>
    %231 = vector.broadcast %230 : vector<1x256xf32> to vector<32x256xf32>
    %232 = arith.mulf %229, %231 : vector<32x256xf32>
    %233 = vector.extract_strided_slice %232 {offsets = [0, 0], sizes = [8, 256], strides = [1, 1]} : vector<32x256xf32> to vector<8x256xf32>
    %234 = vector.extract_strided_slice %232 {offsets = [8, 0], sizes = [8, 256], strides = [1, 1]} : vector<32x256xf32> to vector<8x256xf32>
    %235 = vector.extract_strided_slice %232 {offsets = [16, 0], sizes = [8, 256], strides = [1, 1]} : vector<32x256xf32> to vector<8x256xf32>
    %236 = vector.extract_strided_slice %232 {offsets = [24, 0], sizes = [8, 256], strides = [1, 1]} : vector<32x256xf32> to vector<8x256xf32>
    %c32 = arith.constant 32 : index
    %237 = memref.load %arg4[%c32] : memref<144xf32, #tpu.memory_space<smem>>
    %238 = vector.broadcast %237 : f32 to vector<8x256xf32>
    %239 = arith.mulf %233, %238 : vector<8x256xf32>
    %240 = arith.addf %180, %239 : vector<8x256xf32>
    %c36 = arith.constant 36 : index
    %241 = memref.load %arg4[%c36] : memref<144xf32, #tpu.memory_space<smem>>
    %242 = vector.broadcast %241 : f32 to vector<8x256xf32>
    %243 = arith.mulf %234, %242 : vector<8x256xf32>
    %244 = arith.addf %240, %243 : vector<8x256xf32>
    %c40 = arith.constant 40 : index
    %245 = memref.load %arg4[%c40] : memref<144xf32, #tpu.memory_space<smem>>
    %246 = vector.broadcast %245 : f32 to vector<8x256xf32>
    %247 = arith.mulf %235, %246 : vector<8x256xf32>
    %248 = arith.addf %244, %247 : vector<8x256xf32>
    %c44 = arith.constant 44 : index
    %249 = memref.load %arg4[%c44] : memref<144xf32, #tpu.memory_space<smem>>
    %250 = vector.broadcast %249 : f32 to vector<8x256xf32>
    %251 = arith.mulf %236, %250 : vector<8x256xf32>
    %252 = arith.addf %248, %251 : vector<8x256xf32>
    %c33 = arith.constant 33 : index
    %253 = memref.load %arg4[%c33] : memref<144xf32, #tpu.memory_space<smem>>
    %254 = vector.broadcast %253 : f32 to vector<8x256xf32>
    %255 = arith.mulf %233, %254 : vector<8x256xf32>
    %256 = arith.addf %196, %255 : vector<8x256xf32>
    %c37 = arith.constant 37 : index
    %257 = memref.load %arg4[%c37] : memref<144xf32, #tpu.memory_space<smem>>
    %258 = vector.broadcast %257 : f32 to vector<8x256xf32>
    %259 = arith.mulf %234, %258 : vector<8x256xf32>
    %260 = arith.addf %256, %259 : vector<8x256xf32>
    %c41 = arith.constant 41 : index
    %261 = memref.load %arg4[%c41] : memref<144xf32, #tpu.memory_space<smem>>
    %262 = vector.broadcast %261 : f32 to vector<8x256xf32>
    %263 = arith.mulf %235, %262 : vector<8x256xf32>
    %264 = arith.addf %260, %263 : vector<8x256xf32>
    %c45 = arith.constant 45 : index
    %265 = memref.load %arg4[%c45] : memref<144xf32, #tpu.memory_space<smem>>
    %266 = vector.broadcast %265 : f32 to vector<8x256xf32>
    %267 = arith.mulf %236, %266 : vector<8x256xf32>
    %268 = arith.addf %264, %267 : vector<8x256xf32>
    %c34 = arith.constant 34 : index
    %269 = memref.load %arg4[%c34] : memref<144xf32, #tpu.memory_space<smem>>
    %270 = vector.broadcast %269 : f32 to vector<8x256xf32>
    %271 = arith.mulf %233, %270 : vector<8x256xf32>
    %272 = arith.addf %212, %271 : vector<8x256xf32>
    %c38 = arith.constant 38 : index
    %273 = memref.load %arg4[%c38] : memref<144xf32, #tpu.memory_space<smem>>
    %274 = vector.broadcast %273 : f32 to vector<8x256xf32>
    %275 = arith.mulf %234, %274 : vector<8x256xf32>
    %276 = arith.addf %272, %275 : vector<8x256xf32>
    %c42 = arith.constant 42 : index
    %277 = memref.load %arg4[%c42] : memref<144xf32, #tpu.memory_space<smem>>
    %278 = vector.broadcast %277 : f32 to vector<8x256xf32>
    %279 = arith.mulf %235, %278 : vector<8x256xf32>
    %280 = arith.addf %276, %279 : vector<8x256xf32>
    %c46 = arith.constant 46 : index
    %281 = memref.load %arg4[%c46] : memref<144xf32, #tpu.memory_space<smem>>
    %282 = vector.broadcast %281 : f32 to vector<8x256xf32>
    %283 = arith.mulf %236, %282 : vector<8x256xf32>
    %284 = arith.addf %280, %283 : vector<8x256xf32>
    %c35 = arith.constant 35 : index
    %285 = memref.load %arg4[%c35] : memref<144xf32, #tpu.memory_space<smem>>
    %286 = vector.broadcast %285 : f32 to vector<8x256xf32>
    %287 = arith.mulf %233, %286 : vector<8x256xf32>
    %288 = arith.addf %228, %287 : vector<8x256xf32>
    %c39 = arith.constant 39 : index
    %289 = memref.load %arg4[%c39] : memref<144xf32, #tpu.memory_space<smem>>
    %290 = vector.broadcast %289 : f32 to vector<8x256xf32>
    %291 = arith.mulf %234, %290 : vector<8x256xf32>
    %292 = arith.addf %288, %291 : vector<8x256xf32>
    %c43 = arith.constant 43 : index
    %293 = memref.load %arg4[%c43] : memref<144xf32, #tpu.memory_space<smem>>
    %294 = vector.broadcast %293 : f32 to vector<8x256xf32>
    %295 = arith.mulf %235, %294 : vector<8x256xf32>
    %296 = arith.addf %292, %295 : vector<8x256xf32>
    %c47 = arith.constant 47 : index
    %297 = memref.load %arg4[%c47] : memref<144xf32, #tpu.memory_space<smem>>
    %298 = vector.broadcast %297 : f32 to vector<8x256xf32>
    %299 = arith.mulf %236, %298 : vector<8x256xf32>
    %300 = arith.addf %296, %299 : vector<8x256xf32>
    %c1_i32 = arith.constant 1 : i32
    %301 = tpu.dynamic_rotate %88 by %c1_i32 dim 1 : vector<32x256xf32>, i32 -> vector<32x256xf32>
    %c3_41 = arith.constant 3 : index
    %c0_42 = arith.constant 0 : index
    %302 = vector.load %arg8[%c3_41, %c0_42] : memref<9x256xf32, #tpu.memory_space<vmem>>, vector<1x256xf32>
    %303 = vector.broadcast %302 : vector<1x256xf32> to vector<32x256xf32>
    %304 = arith.mulf %301, %303 : vector<32x256xf32>
    %305 = vector.extract_strided_slice %304 {offsets = [0, 0], sizes = [8, 256], strides = [1, 1]} : vector<32x256xf32> to vector<8x256xf32>
    %306 = vector.extract_strided_slice %304 {offsets = [8, 0], sizes = [8, 256], strides = [1, 1]} : vector<32x256xf32> to vector<8x256xf32>
    %307 = vector.extract_strided_slice %304 {offsets = [16, 0], sizes = [8, 256], strides = [1, 1]} : vector<32x256xf32> to vector<8x256xf32>
    %308 = vector.extract_strided_slice %304 {offsets = [24, 0], sizes = [8, 256], strides = [1, 1]} : vector<32x256xf32> to vector<8x256xf32>
    %c48 = arith.constant 48 : index
    %309 = memref.load %arg4[%c48] : memref<144xf32, #tpu.memory_space<smem>>
    %310 = vector.broadcast %309 : f32 to vector<8x256xf32>
    %311 = arith.mulf %305, %310 : vector<8x256xf32>
    %312 = arith.addf %252, %311 : vector<8x256xf32>
    %c52 = arith.constant 52 : index
    %313 = memref.load %arg4[%c52] : memref<144xf32, #tpu.memory_space<smem>>
    %314 = vector.broadcast %313 : f32 to vector<8x256xf32>
    %315 = arith.mulf %306, %314 : vector<8x256xf32>
    %316 = arith.addf %312, %315 : vector<8x256xf32>
    %c56 = arith.constant 56 : index
    %317 = memref.load %arg4[%c56] : memref<144xf32, #tpu.memory_space<smem>>
    %318 = vector.broadcast %317 : f32 to vector<8x256xf32>
    %319 = arith.mulf %307, %318 : vector<8x256xf32>
    %320 = arith.addf %316, %319 : vector<8x256xf32>
    %c60 = arith.constant 60 : index
    %321 = memref.load %arg4[%c60] : memref<144xf32, #tpu.memory_space<smem>>
    %322 = vector.broadcast %321 : f32 to vector<8x256xf32>
    %323 = arith.mulf %308, %322 : vector<8x256xf32>
    %324 = arith.addf %320, %323 : vector<8x256xf32>
    %c49 = arith.constant 49 : index
    %325 = memref.load %arg4[%c49] : memref<144xf32, #tpu.memory_space<smem>>
    %326 = vector.broadcast %325 : f32 to vector<8x256xf32>
    %327 = arith.mulf %305, %326 : vector<8x256xf32>
    %328 = arith.addf %268, %327 : vector<8x256xf32>
    %c53 = arith.constant 53 : index
    %329 = memref.load %arg4[%c53] : memref<144xf32, #tpu.memory_space<smem>>
    %330 = vector.broadcast %329 : f32 to vector<8x256xf32>
    %331 = arith.mulf %306, %330 : vector<8x256xf32>
    %332 = arith.addf %328, %331 : vector<8x256xf32>
    %c57 = arith.constant 57 : index
    %333 = memref.load %arg4[%c57] : memref<144xf32, #tpu.memory_space<smem>>
    %334 = vector.broadcast %333 : f32 to vector<8x256xf32>
    %335 = arith.mulf %307, %334 : vector<8x256xf32>
    %336 = arith.addf %332, %335 : vector<8x256xf32>
    %c61 = arith.constant 61 : index
    %337 = memref.load %arg4[%c61] : memref<144xf32, #tpu.memory_space<smem>>
    %338 = vector.broadcast %337 : f32 to vector<8x256xf32>
    %339 = arith.mulf %308, %338 : vector<8x256xf32>
    %340 = arith.addf %336, %339 : vector<8x256xf32>
    %c50 = arith.constant 50 : index
    %341 = memref.load %arg4[%c50] : memref<144xf32, #tpu.memory_space<smem>>
    %342 = vector.broadcast %341 : f32 to vector<8x256xf32>
    %343 = arith.mulf %305, %342 : vector<8x256xf32>
    %344 = arith.addf %284, %343 : vector<8x256xf32>
    %c54 = arith.constant 54 : index
    %345 = memref.load %arg4[%c54] : memref<144xf32, #tpu.memory_space<smem>>
    %346 = vector.broadcast %345 : f32 to vector<8x256xf32>
    %347 = arith.mulf %306, %346 : vector<8x256xf32>
    %348 = arith.addf %344, %347 : vector<8x256xf32>
    %c58 = arith.constant 58 : index
    %349 = memref.load %arg4[%c58] : memref<144xf32, #tpu.memory_space<smem>>
    %350 = vector.broadcast %349 : f32 to vector<8x256xf32>
    %351 = arith.mulf %307, %350 : vector<8x256xf32>
    %352 = arith.addf %348, %351 : vector<8x256xf32>
    %c62 = arith.constant 62 : index
    %353 = memref.load %arg4[%c62] : memref<144xf32, #tpu.memory_space<smem>>
    %354 = vector.broadcast %353 : f32 to vector<8x256xf32>
    %355 = arith.mulf %308, %354 : vector<8x256xf32>
    %356 = arith.addf %352, %355 : vector<8x256xf32>
    %c51 = arith.constant 51 : index
    %357 = memref.load %arg4[%c51] : memref<144xf32, #tpu.memory_space<smem>>
    %358 = vector.broadcast %357 : f32 to vector<8x256xf32>
    %359 = arith.mulf %305, %358 : vector<8x256xf32>
    %360 = arith.addf %300, %359 : vector<8x256xf32>
    %c55 = arith.constant 55 : index
    %361 = memref.load %arg4[%c55] : memref<144xf32, #tpu.memory_space<smem>>
    %362 = vector.broadcast %361 : f32 to vector<8x256xf32>
    %363 = arith.mulf %306, %362 : vector<8x256xf32>
    %364 = arith.addf %360, %363 : vector<8x256xf32>
    %c59 = arith.constant 59 : index
    %365 = memref.load %arg4[%c59] : memref<144xf32, #tpu.memory_space<smem>>
    %366 = vector.broadcast %365 : f32 to vector<8x256xf32>
    %367 = arith.mulf %307, %366 : vector<8x256xf32>
    %368 = arith.addf %364, %367 : vector<8x256xf32>
    %c63 = arith.constant 63 : index
    %369 = memref.load %arg4[%c63] : memref<144xf32, #tpu.memory_space<smem>>
    %370 = vector.broadcast %369 : f32 to vector<8x256xf32>
    %371 = arith.mulf %308, %370 : vector<8x256xf32>
    %372 = arith.addf %368, %371 : vector<8x256xf32>
    %373 = vector.extract_strided_slice %88 {offsets = [0, 0], sizes = [8, 256], strides = [1, 1]} : vector<32x256xf32> to vector<8x256xf32>
    %374 = vector.extract_strided_slice %88 {offsets = [8, 0], sizes = [8, 256], strides = [1, 1]} : vector<32x256xf32> to vector<8x256xf32>
    %375 = vector.extract_strided_slice %88 {offsets = [16, 0], sizes = [8, 256], strides = [1, 1]} : vector<32x256xf32> to vector<8x256xf32>
    %376 = vector.extract_strided_slice %88 {offsets = [24, 0], sizes = [8, 256], strides = [1, 1]} : vector<32x256xf32> to vector<8x256xf32>
    %c64 = arith.constant 64 : index
    %377 = memref.load %arg4[%c64] : memref<144xf32, #tpu.memory_space<smem>>
    %378 = vector.broadcast %377 : f32 to vector<8x256xf32>
    %379 = arith.mulf %373, %378 : vector<8x256xf32>
    %380 = arith.addf %324, %379 : vector<8x256xf32>
    %c68 = arith.constant 68 : index
    %381 = memref.load %arg4[%c68] : memref<144xf32, #tpu.memory_space<smem>>
    %382 = vector.broadcast %381 : f32 to vector<8x256xf32>
    %383 = arith.mulf %374, %382 : vector<8x256xf32>
    %384 = arith.addf %380, %383 : vector<8x256xf32>
    %c72 = arith.constant 72 : index
    %385 = memref.load %arg4[%c72] : memref<144xf32, #tpu.memory_space<smem>>
    %386 = vector.broadcast %385 : f32 to vector<8x256xf32>
    %387 = arith.mulf %375, %386 : vector<8x256xf32>
    %388 = arith.addf %384, %387 : vector<8x256xf32>
    %c76 = arith.constant 76 : index
    %389 = memref.load %arg4[%c76] : memref<144xf32, #tpu.memory_space<smem>>
    %390 = vector.broadcast %389 : f32 to vector<8x256xf32>
    %391 = arith.mulf %376, %390 : vector<8x256xf32>
    %392 = arith.addf %388, %391 : vector<8x256xf32>
    %c65 = arith.constant 65 : index
    %393 = memref.load %arg4[%c65] : memref<144xf32, #tpu.memory_space<smem>>
    %394 = vector.broadcast %393 : f32 to vector<8x256xf32>
    %395 = arith.mulf %373, %394 : vector<8x256xf32>
    %396 = arith.addf %340, %395 : vector<8x256xf32>
    %c69 = arith.constant 69 : index
    %397 = memref.load %arg4[%c69] : memref<144xf32, #tpu.memory_space<smem>>
    %398 = vector.broadcast %397 : f32 to vector<8x256xf32>
    %399 = arith.mulf %374, %398 : vector<8x256xf32>
    %400 = arith.addf %396, %399 : vector<8x256xf32>
    %c73 = arith.constant 73 : index
    %401 = memref.load %arg4[%c73] : memref<144xf32, #tpu.memory_space<smem>>
    %402 = vector.broadcast %401 : f32 to vector<8x256xf32>
    %403 = arith.mulf %375, %402 : vector<8x256xf32>
    %404 = arith.addf %400, %403 : vector<8x256xf32>
    %c77 = arith.constant 77 : index
    %405 = memref.load %arg4[%c77] : memref<144xf32, #tpu.memory_space<smem>>
    %406 = vector.broadcast %405 : f32 to vector<8x256xf32>
    %407 = arith.mulf %376, %406 : vector<8x256xf32>
    %408 = arith.addf %404, %407 : vector<8x256xf32>
    %c66 = arith.constant 66 : index
    %409 = memref.load %arg4[%c66] : memref<144xf32, #tpu.memory_space<smem>>
    %410 = vector.broadcast %409 : f32 to vector<8x256xf32>
    %411 = arith.mulf %373, %410 : vector<8x256xf32>
    %412 = arith.addf %356, %411 : vector<8x256xf32>
    %c70 = arith.constant 70 : index
    %413 = memref.load %arg4[%c70] : memref<144xf32, #tpu.memory_space<smem>>
    %414 = vector.broadcast %413 : f32 to vector<8x256xf32>
    %415 = arith.mulf %374, %414 : vector<8x256xf32>
    %416 = arith.addf %412, %415 : vector<8x256xf32>
    %c74 = arith.constant 74 : index
    %417 = memref.load %arg4[%c74] : memref<144xf32, #tpu.memory_space<smem>>
    %418 = vector.broadcast %417 : f32 to vector<8x256xf32>
    %419 = arith.mulf %375, %418 : vector<8x256xf32>
    %420 = arith.addf %416, %419 : vector<8x256xf32>
    %c78 = arith.constant 78 : index
    %421 = memref.load %arg4[%c78] : memref<144xf32, #tpu.memory_space<smem>>
    %422 = vector.broadcast %421 : f32 to vector<8x256xf32>
    %423 = arith.mulf %376, %422 : vector<8x256xf32>
    %424 = arith.addf %420, %423 : vector<8x256xf32>
    %c67 = arith.constant 67 : index
    %425 = memref.load %arg4[%c67] : memref<144xf32, #tpu.memory_space<smem>>
    %426 = vector.broadcast %425 : f32 to vector<8x256xf32>
    %427 = arith.mulf %373, %426 : vector<8x256xf32>
    %428 = arith.addf %372, %427 : vector<8x256xf32>
    %c71 = arith.constant 71 : index
    %429 = memref.load %arg4[%c71] : memref<144xf32, #tpu.memory_space<smem>>
    %430 = vector.broadcast %429 : f32 to vector<8x256xf32>
    %431 = arith.mulf %374, %430 : vector<8x256xf32>
    %432 = arith.addf %428, %431 : vector<8x256xf32>
    %c75 = arith.constant 75 : index
    %433 = memref.load %arg4[%c75] : memref<144xf32, #tpu.memory_space<smem>>
    %434 = vector.broadcast %433 : f32 to vector<8x256xf32>
    %435 = arith.mulf %375, %434 : vector<8x256xf32>
    %436 = arith.addf %432, %435 : vector<8x256xf32>
    %c79 = arith.constant 79 : index
    %437 = memref.load %arg4[%c79] : memref<144xf32, #tpu.memory_space<smem>>
    %438 = vector.broadcast %437 : f32 to vector<8x256xf32>
    %439 = arith.mulf %376, %438 : vector<8x256xf32>
    %440 = arith.addf %436, %439 : vector<8x256xf32>
    %c255_i32 = arith.constant 255 : i32
    %441 = tpu.dynamic_rotate %88 by %c255_i32 dim 1 : vector<32x256xf32>, i32 -> vector<32x256xf32>
    %c5_43 = arith.constant 5 : index
    %c0_44 = arith.constant 0 : index
    %442 = vector.load %arg8[%c5_43, %c0_44] : memref<9x256xf32, #tpu.memory_space<vmem>>, vector<1x256xf32>
    %443 = vector.broadcast %442 : vector<1x256xf32> to vector<32x256xf32>
    %444 = arith.mulf %441, %443 : vector<32x256xf32>
    %445 = vector.extract_strided_slice %444 {offsets = [0, 0], sizes = [8, 256], strides = [1, 1]} : vector<32x256xf32> to vector<8x256xf32>
    %446 = vector.extract_strided_slice %444 {offsets = [8, 0], sizes = [8, 256], strides = [1, 1]} : vector<32x256xf32> to vector<8x256xf32>
    %447 = vector.extract_strided_slice %444 {offsets = [16, 0], sizes = [8, 256], strides = [1, 1]} : vector<32x256xf32> to vector<8x256xf32>
    %448 = vector.extract_strided_slice %444 {offsets = [24, 0], sizes = [8, 256], strides = [1, 1]} : vector<32x256xf32> to vector<8x256xf32>
    %c80 = arith.constant 80 : index
    %449 = memref.load %arg4[%c80] : memref<144xf32, #tpu.memory_space<smem>>
    %450 = vector.broadcast %449 : f32 to vector<8x256xf32>
    %451 = arith.mulf %445, %450 : vector<8x256xf32>
    %452 = arith.addf %392, %451 : vector<8x256xf32>
    %c84 = arith.constant 84 : index
    %453 = memref.load %arg4[%c84] : memref<144xf32, #tpu.memory_space<smem>>
    %454 = vector.broadcast %453 : f32 to vector<8x256xf32>
    %455 = arith.mulf %446, %454 : vector<8x256xf32>
    %456 = arith.addf %452, %455 : vector<8x256xf32>
    %c88 = arith.constant 88 : index
    %457 = memref.load %arg4[%c88] : memref<144xf32, #tpu.memory_space<smem>>
    %458 = vector.broadcast %457 : f32 to vector<8x256xf32>
    %459 = arith.mulf %447, %458 : vector<8x256xf32>
    %460 = arith.addf %456, %459 : vector<8x256xf32>
    %c92 = arith.constant 92 : index
    %461 = memref.load %arg4[%c92] : memref<144xf32, #tpu.memory_space<smem>>
    %462 = vector.broadcast %461 : f32 to vector<8x256xf32>
    %463 = arith.mulf %448, %462 : vector<8x256xf32>
    %464 = arith.addf %460, %463 : vector<8x256xf32>
    %c81 = arith.constant 81 : index
    %465 = memref.load %arg4[%c81] : memref<144xf32, #tpu.memory_space<smem>>
    %466 = vector.broadcast %465 : f32 to vector<8x256xf32>
    %467 = arith.mulf %445, %466 : vector<8x256xf32>
    %468 = arith.addf %408, %467 : vector<8x256xf32>
    %c85 = arith.constant 85 : index
    %469 = memref.load %arg4[%c85] : memref<144xf32, #tpu.memory_space<smem>>
    %470 = vector.broadcast %469 : f32 to vector<8x256xf32>
    %471 = arith.mulf %446, %470 : vector<8x256xf32>
    %472 = arith.addf %468, %471 : vector<8x256xf32>
    %c89 = arith.constant 89 : index
    %473 = memref.load %arg4[%c89] : memref<144xf32, #tpu.memory_space<smem>>
    %474 = vector.broadcast %473 : f32 to vector<8x256xf32>
    %475 = arith.mulf %447, %474 : vector<8x256xf32>
    %476 = arith.addf %472, %475 : vector<8x256xf32>
    %c93 = arith.constant 93 : index
    %477 = memref.load %arg4[%c93] : memref<144xf32, #tpu.memory_space<smem>>
    %478 = vector.broadcast %477 : f32 to vector<8x256xf32>
    %479 = arith.mulf %448, %478 : vector<8x256xf32>
    %480 = arith.addf %476, %479 : vector<8x256xf32>
    %c82 = arith.constant 82 : index
    %481 = memref.load %arg4[%c82] : memref<144xf32, #tpu.memory_space<smem>>
    %482 = vector.broadcast %481 : f32 to vector<8x256xf32>
    %483 = arith.mulf %445, %482 : vector<8x256xf32>
    %484 = arith.addf %424, %483 : vector<8x256xf32>
    %c86 = arith.constant 86 : index
    %485 = memref.load %arg4[%c86] : memref<144xf32, #tpu.memory_space<smem>>
    %486 = vector.broadcast %485 : f32 to vector<8x256xf32>
    %487 = arith.mulf %446, %486 : vector<8x256xf32>
    %488 = arith.addf %484, %487 : vector<8x256xf32>
    %c90 = arith.constant 90 : index
    %489 = memref.load %arg4[%c90] : memref<144xf32, #tpu.memory_space<smem>>
    %490 = vector.broadcast %489 : f32 to vector<8x256xf32>
    %491 = arith.mulf %447, %490 : vector<8x256xf32>
    %492 = arith.addf %488, %491 : vector<8x256xf32>
    %c94 = arith.constant 94 : index
    %493 = memref.load %arg4[%c94] : memref<144xf32, #tpu.memory_space<smem>>
    %494 = vector.broadcast %493 : f32 to vector<8x256xf32>
    %495 = arith.mulf %448, %494 : vector<8x256xf32>
    %496 = arith.addf %492, %495 : vector<8x256xf32>
    %c83 = arith.constant 83 : index
    %497 = memref.load %arg4[%c83] : memref<144xf32, #tpu.memory_space<smem>>
    %498 = vector.broadcast %497 : f32 to vector<8x256xf32>
    %499 = arith.mulf %445, %498 : vector<8x256xf32>
    %500 = arith.addf %440, %499 : vector<8x256xf32>
    %c87 = arith.constant 87 : index
    %501 = memref.load %arg4[%c87] : memref<144xf32, #tpu.memory_space<smem>>
    %502 = vector.broadcast %501 : f32 to vector<8x256xf32>
    %503 = arith.mulf %446, %502 : vector<8x256xf32>
    %504 = arith.addf %500, %503 : vector<8x256xf32>
    %c91 = arith.constant 91 : index
    %505 = memref.load %arg4[%c91] : memref<144xf32, #tpu.memory_space<smem>>
    %506 = vector.broadcast %505 : f32 to vector<8x256xf32>
    %507 = arith.mulf %447, %506 : vector<8x256xf32>
    %508 = arith.addf %504, %507 : vector<8x256xf32>
    %c95 = arith.constant 95 : index
    %509 = memref.load %arg4[%c95] : memref<144xf32, #tpu.memory_space<smem>>
    %510 = vector.broadcast %509 : f32 to vector<8x256xf32>
    %511 = arith.mulf %448, %510 : vector<8x256xf32>
    %512 = arith.addf %508, %511 : vector<8x256xf32>
    %c241_i32 = arith.constant 241 : i32
    %513 = tpu.dynamic_rotate %88 by %c241_i32 dim 1 : vector<32x256xf32>, i32 -> vector<32x256xf32>
    %c6_45 = arith.constant 6 : index
    %c0_46 = arith.constant 0 : index
    %514 = vector.load %arg8[%c6_45, %c0_46] : memref<9x256xf32, #tpu.memory_space<vmem>>, vector<1x256xf32>
    %515 = vector.broadcast %514 : vector<1x256xf32> to vector<32x256xf32>
    %516 = arith.mulf %513, %515 : vector<32x256xf32>
    %517 = vector.extract_strided_slice %516 {offsets = [0, 0], sizes = [8, 256], strides = [1, 1]} : vector<32x256xf32> to vector<8x256xf32>
    %518 = vector.extract_strided_slice %516 {offsets = [8, 0], sizes = [8, 256], strides = [1, 1]} : vector<32x256xf32> to vector<8x256xf32>
    %519 = vector.extract_strided_slice %516 {offsets = [16, 0], sizes = [8, 256], strides = [1, 1]} : vector<32x256xf32> to vector<8x256xf32>
    %520 = vector.extract_strided_slice %516 {offsets = [24, 0], sizes = [8, 256], strides = [1, 1]} : vector<32x256xf32> to vector<8x256xf32>
    %c96 = arith.constant 96 : index
    %521 = memref.load %arg4[%c96] : memref<144xf32, #tpu.memory_space<smem>>
    %522 = vector.broadcast %521 : f32 to vector<8x256xf32>
    %523 = arith.mulf %517, %522 : vector<8x256xf32>
    %524 = arith.addf %464, %523 : vector<8x256xf32>
    %c100 = arith.constant 100 : index
    %525 = memref.load %arg4[%c100] : memref<144xf32, #tpu.memory_space<smem>>
    %526 = vector.broadcast %525 : f32 to vector<8x256xf32>
    %527 = arith.mulf %518, %526 : vector<8x256xf32>
    %528 = arith.addf %524, %527 : vector<8x256xf32>
    %c104 = arith.constant 104 : index
    %529 = memref.load %arg4[%c104] : memref<144xf32, #tpu.memory_space<smem>>
    %530 = vector.broadcast %529 : f32 to vector<8x256xf32>
    %531 = arith.mulf %519, %530 : vector<8x256xf32>
    %532 = arith.addf %528, %531 : vector<8x256xf32>
    %c108 = arith.constant 108 : index
    %533 = memref.load %arg4[%c108] : memref<144xf32, #tpu.memory_space<smem>>
    %534 = vector.broadcast %533 : f32 to vector<8x256xf32>
    %535 = arith.mulf %520, %534 : vector<8x256xf32>
    %536 = arith.addf %532, %535 : vector<8x256xf32>
    %c97 = arith.constant 97 : index
    %537 = memref.load %arg4[%c97] : memref<144xf32, #tpu.memory_space<smem>>
    %538 = vector.broadcast %537 : f32 to vector<8x256xf32>
    %539 = arith.mulf %517, %538 : vector<8x256xf32>
    %540 = arith.addf %480, %539 : vector<8x256xf32>
    %c101 = arith.constant 101 : index
    %541 = memref.load %arg4[%c101] : memref<144xf32, #tpu.memory_space<smem>>
    %542 = vector.broadcast %541 : f32 to vector<8x256xf32>
    %543 = arith.mulf %518, %542 : vector<8x256xf32>
    %544 = arith.addf %540, %543 : vector<8x256xf32>
    %c105 = arith.constant 105 : index
    %545 = memref.load %arg4[%c105] : memref<144xf32, #tpu.memory_space<smem>>
    %546 = vector.broadcast %545 : f32 to vector<8x256xf32>
    %547 = arith.mulf %519, %546 : vector<8x256xf32>
    %548 = arith.addf %544, %547 : vector<8x256xf32>
    %c109 = arith.constant 109 : index
    %549 = memref.load %arg4[%c109] : memref<144xf32, #tpu.memory_space<smem>>
    %550 = vector.broadcast %549 : f32 to vector<8x256xf32>
    %551 = arith.mulf %520, %550 : vector<8x256xf32>
    %552 = arith.addf %548, %551 : vector<8x256xf32>
    %c98 = arith.constant 98 : index
    %553 = memref.load %arg4[%c98] : memref<144xf32, #tpu.memory_space<smem>>
    %554 = vector.broadcast %553 : f32 to vector<8x256xf32>
    %555 = arith.mulf %517, %554 : vector<8x256xf32>
    %556 = arith.addf %496, %555 : vector<8x256xf32>
    %c102 = arith.constant 102 : index
    %557 = memref.load %arg4[%c102] : memref<144xf32, #tpu.memory_space<smem>>
    %558 = vector.broadcast %557 : f32 to vector<8x256xf32>
    %559 = arith.mulf %518, %558 : vector<8x256xf32>
    %560 = arith.addf %556, %559 : vector<8x256xf32>
    %c106 = arith.constant 106 : index
    %561 = memref.load %arg4[%c106] : memref<144xf32, #tpu.memory_space<smem>>
    %562 = vector.broadcast %561 : f32 to vector<8x256xf32>
    %563 = arith.mulf %519, %562 : vector<8x256xf32>
    %564 = arith.addf %560, %563 : vector<8x256xf32>
    %c110 = arith.constant 110 : index
    %565 = memref.load %arg4[%c110] : memref<144xf32, #tpu.memory_space<smem>>
    %566 = vector.broadcast %565 : f32 to vector<8x256xf32>
    %567 = arith.mulf %520, %566 : vector<8x256xf32>
    %568 = arith.addf %564, %567 : vector<8x256xf32>
    %c99 = arith.constant 99 : index
    %569 = memref.load %arg4[%c99] : memref<144xf32, #tpu.memory_space<smem>>
    %570 = vector.broadcast %569 : f32 to vector<8x256xf32>
    %571 = arith.mulf %517, %570 : vector<8x256xf32>
    %572 = arith.addf %512, %571 : vector<8x256xf32>
    %c103 = arith.constant 103 : index
    %573 = memref.load %arg4[%c103] : memref<144xf32, #tpu.memory_space<smem>>
    %574 = vector.broadcast %573 : f32 to vector<8x256xf32>
    %575 = arith.mulf %518, %574 : vector<8x256xf32>
    %576 = arith.addf %572, %575 : vector<8x256xf32>
    %c107 = arith.constant 107 : index
    %577 = memref.load %arg4[%c107] : memref<144xf32, #tpu.memory_space<smem>>
    %578 = vector.broadcast %577 : f32 to vector<8x256xf32>
    %579 = arith.mulf %519, %578 : vector<8x256xf32>
    %580 = arith.addf %576, %579 : vector<8x256xf32>
    %c111 = arith.constant 111 : index
    %581 = memref.load %arg4[%c111] : memref<144xf32, #tpu.memory_space<smem>>
    %582 = vector.broadcast %581 : f32 to vector<8x256xf32>
    %583 = arith.mulf %520, %582 : vector<8x256xf32>
    %584 = arith.addf %580, %583 : vector<8x256xf32>
    %c240_i32 = arith.constant 240 : i32
    %585 = tpu.dynamic_rotate %88 by %c240_i32 dim 1 : vector<32x256xf32>, i32 -> vector<32x256xf32>
    %c7_47 = arith.constant 7 : index
    %c0_48 = arith.constant 0 : index
    %586 = vector.load %arg8[%c7_47, %c0_48] : memref<9x256xf32, #tpu.memory_space<vmem>>, vector<1x256xf32>
    %587 = vector.broadcast %586 : vector<1x256xf32> to vector<32x256xf32>
    %588 = arith.mulf %585, %587 : vector<32x256xf32>
    %589 = vector.extract_strided_slice %588 {offsets = [0, 0], sizes = [8, 256], strides = [1, 1]} : vector<32x256xf32> to vector<8x256xf32>
    %590 = vector.extract_strided_slice %588 {offsets = [8, 0], sizes = [8, 256], strides = [1, 1]} : vector<32x256xf32> to vector<8x256xf32>
    %591 = vector.extract_strided_slice %588 {offsets = [16, 0], sizes = [8, 256], strides = [1, 1]} : vector<32x256xf32> to vector<8x256xf32>
    %592 = vector.extract_strided_slice %588 {offsets = [24, 0], sizes = [8, 256], strides = [1, 1]} : vector<32x256xf32> to vector<8x256xf32>
    %c112 = arith.constant 112 : index
    %593 = memref.load %arg4[%c112] : memref<144xf32, #tpu.memory_space<smem>>
    %594 = vector.broadcast %593 : f32 to vector<8x256xf32>
    %595 = arith.mulf %589, %594 : vector<8x256xf32>
    %596 = arith.addf %536, %595 : vector<8x256xf32>
    %c116 = arith.constant 116 : index
    %597 = memref.load %arg4[%c116] : memref<144xf32, #tpu.memory_space<smem>>
    %598 = vector.broadcast %597 : f32 to vector<8x256xf32>
    %599 = arith.mulf %590, %598 : vector<8x256xf32>
    %600 = arith.addf %596, %599 : vector<8x256xf32>
    %c120 = arith.constant 120 : index
    %601 = memref.load %arg4[%c120] : memref<144xf32, #tpu.memory_space<smem>>
    %602 = vector.broadcast %601 : f32 to vector<8x256xf32>
    %603 = arith.mulf %591, %602 : vector<8x256xf32>
    %604 = arith.addf %600, %603 : vector<8x256xf32>
    %c124 = arith.constant 124 : index
    %605 = memref.load %arg4[%c124] : memref<144xf32, #tpu.memory_space<smem>>
    %606 = vector.broadcast %605 : f32 to vector<8x256xf32>
    %607 = arith.mulf %592, %606 : vector<8x256xf32>
    %608 = arith.addf %604, %607 : vector<8x256xf32>
    %c113 = arith.constant 113 : index
    %609 = memref.load %arg4[%c113] : memref<144xf32, #tpu.memory_space<smem>>
    %610 = vector.broadcast %609 : f32 to vector<8x256xf32>
    %611 = arith.mulf %589, %610 : vector<8x256xf32>
    %612 = arith.addf %552, %611 : vector<8x256xf32>
    %c117 = arith.constant 117 : index
    %613 = memref.load %arg4[%c117] : memref<144xf32, #tpu.memory_space<smem>>
    %614 = vector.broadcast %613 : f32 to vector<8x256xf32>
    %615 = arith.mulf %590, %614 : vector<8x256xf32>
    %616 = arith.addf %612, %615 : vector<8x256xf32>
    %c121 = arith.constant 121 : index
    %617 = memref.load %arg4[%c121] : memref<144xf32, #tpu.memory_space<smem>>
    %618 = vector.broadcast %617 : f32 to vector<8x256xf32>
    %619 = arith.mulf %591, %618 : vector<8x256xf32>
    %620 = arith.addf %616, %619 : vector<8x256xf32>
    %c125 = arith.constant 125 : index
    %621 = memref.load %arg4[%c125] : memref<144xf32, #tpu.memory_space<smem>>
    %622 = vector.broadcast %621 : f32 to vector<8x256xf32>
    %623 = arith.mulf %592, %622 : vector<8x256xf32>
    %624 = arith.addf %620, %623 : vector<8x256xf32>
    %c114 = arith.constant 114 : index
    %625 = memref.load %arg4[%c114] : memref<144xf32, #tpu.memory_space<smem>>
    %626 = vector.broadcast %625 : f32 to vector<8x256xf32>
    %627 = arith.mulf %589, %626 : vector<8x256xf32>
    %628 = arith.addf %568, %627 : vector<8x256xf32>
    %c118 = arith.constant 118 : index
    %629 = memref.load %arg4[%c118] : memref<144xf32, #tpu.memory_space<smem>>
    %630 = vector.broadcast %629 : f32 to vector<8x256xf32>
    %631 = arith.mulf %590, %630 : vector<8x256xf32>
    %632 = arith.addf %628, %631 : vector<8x256xf32>
    %c122 = arith.constant 122 : index
    %633 = memref.load %arg4[%c122] : memref<144xf32, #tpu.memory_space<smem>>
    %634 = vector.broadcast %633 : f32 to vector<8x256xf32>
    %635 = arith.mulf %591, %634 : vector<8x256xf32>
    %636 = arith.addf %632, %635 : vector<8x256xf32>
    %c126 = arith.constant 126 : index
    %637 = memref.load %arg4[%c126] : memref<144xf32, #tpu.memory_space<smem>>
    %638 = vector.broadcast %637 : f32 to vector<8x256xf32>
    %639 = arith.mulf %592, %638 : vector<8x256xf32>
    %640 = arith.addf %636, %639 : vector<8x256xf32>
    %c115 = arith.constant 115 : index
    %641 = memref.load %arg4[%c115] : memref<144xf32, #tpu.memory_space<smem>>
    %642 = vector.broadcast %641 : f32 to vector<8x256xf32>
    %643 = arith.mulf %589, %642 : vector<8x256xf32>
    %644 = arith.addf %584, %643 : vector<8x256xf32>
    %c119 = arith.constant 119 : index
    %645 = memref.load %arg4[%c119] : memref<144xf32, #tpu.memory_space<smem>>
    %646 = vector.broadcast %645 : f32 to vector<8x256xf32>
    %647 = arith.mulf %590, %646 : vector<8x256xf32>
    %648 = arith.addf %644, %647 : vector<8x256xf32>
    %c123 = arith.constant 123 : index
    %649 = memref.load %arg4[%c123] : memref<144xf32, #tpu.memory_space<smem>>
    %650 = vector.broadcast %649 : f32 to vector<8x256xf32>
    %651 = arith.mulf %591, %650 : vector<8x256xf32>
    %652 = arith.addf %648, %651 : vector<8x256xf32>
    %c127 = arith.constant 127 : index
    %653 = memref.load %arg4[%c127] : memref<144xf32, #tpu.memory_space<smem>>
    %654 = vector.broadcast %653 : f32 to vector<8x256xf32>
    %655 = arith.mulf %592, %654 : vector<8x256xf32>
    %656 = arith.addf %652, %655 : vector<8x256xf32>
    %c239_i32 = arith.constant 239 : i32
    %657 = tpu.dynamic_rotate %88 by %c239_i32 dim 1 : vector<32x256xf32>, i32 -> vector<32x256xf32>
    %c8_49 = arith.constant 8 : index
    %c0_50 = arith.constant 0 : index
    %658 = vector.load %arg8[%c8_49, %c0_50] : memref<9x256xf32, #tpu.memory_space<vmem>>, vector<1x256xf32>
    %659 = vector.broadcast %658 : vector<1x256xf32> to vector<32x256xf32>
    %660 = arith.mulf %657, %659 : vector<32x256xf32>
    %661 = vector.extract_strided_slice %660 {offsets = [0, 0], sizes = [8, 256], strides = [1, 1]} : vector<32x256xf32> to vector<8x256xf32>
    %662 = vector.extract_strided_slice %660 {offsets = [8, 0], sizes = [8, 256], strides = [1, 1]} : vector<32x256xf32> to vector<8x256xf32>
    %663 = vector.extract_strided_slice %660 {offsets = [16, 0], sizes = [8, 256], strides = [1, 1]} : vector<32x256xf32> to vector<8x256xf32>
    %664 = vector.extract_strided_slice %660 {offsets = [24, 0], sizes = [8, 256], strides = [1, 1]} : vector<32x256xf32> to vector<8x256xf32>
    %c128 = arith.constant 128 : index
    %665 = memref.load %arg4[%c128] : memref<144xf32, #tpu.memory_space<smem>>
    %666 = vector.broadcast %665 : f32 to vector<8x256xf32>
    %667 = arith.mulf %661, %666 : vector<8x256xf32>
    %668 = arith.addf %608, %667 : vector<8x256xf32>
    %c132 = arith.constant 132 : index
    %669 = memref.load %arg4[%c132] : memref<144xf32, #tpu.memory_space<smem>>
    %670 = vector.broadcast %669 : f32 to vector<8x256xf32>
    %671 = arith.mulf %662, %670 : vector<8x256xf32>
    %672 = arith.addf %668, %671 : vector<8x256xf32>
    %c136 = arith.constant 136 : index
    %673 = memref.load %arg4[%c136] : memref<144xf32, #tpu.memory_space<smem>>
    %674 = vector.broadcast %673 : f32 to vector<8x256xf32>
    %675 = arith.mulf %663, %674 : vector<8x256xf32>
    %676 = arith.addf %672, %675 : vector<8x256xf32>
    %c140 = arith.constant 140 : index
    %677 = memref.load %arg4[%c140] : memref<144xf32, #tpu.memory_space<smem>>
    %678 = vector.broadcast %677 : f32 to vector<8x256xf32>
    %679 = arith.mulf %664, %678 : vector<8x256xf32>
    %680 = arith.addf %676, %679 : vector<8x256xf32>
    %c129 = arith.constant 129 : index
    %681 = memref.load %arg4[%c129] : memref<144xf32, #tpu.memory_space<smem>>
    %682 = vector.broadcast %681 : f32 to vector<8x256xf32>
    %683 = arith.mulf %661, %682 : vector<8x256xf32>
    %684 = arith.addf %624, %683 : vector<8x256xf32>
    %c133 = arith.constant 133 : index
    %685 = memref.load %arg4[%c133] : memref<144xf32, #tpu.memory_space<smem>>
    %686 = vector.broadcast %685 : f32 to vector<8x256xf32>
    %687 = arith.mulf %662, %686 : vector<8x256xf32>
    %688 = arith.addf %684, %687 : vector<8x256xf32>
    %c137 = arith.constant 137 : index
    %689 = memref.load %arg4[%c137] : memref<144xf32, #tpu.memory_space<smem>>
    %690 = vector.broadcast %689 : f32 to vector<8x256xf32>
    %691 = arith.mulf %663, %690 : vector<8x256xf32>
    %692 = arith.addf %688, %691 : vector<8x256xf32>
    %c141 = arith.constant 141 : index
    %693 = memref.load %arg4[%c141] : memref<144xf32, #tpu.memory_space<smem>>
    %694 = vector.broadcast %693 : f32 to vector<8x256xf32>
    %695 = arith.mulf %664, %694 : vector<8x256xf32>
    %696 = arith.addf %692, %695 : vector<8x256xf32>
    %c130 = arith.constant 130 : index
    %697 = memref.load %arg4[%c130] : memref<144xf32, #tpu.memory_space<smem>>
    %698 = vector.broadcast %697 : f32 to vector<8x256xf32>
    %699 = arith.mulf %661, %698 : vector<8x256xf32>
    %700 = arith.addf %640, %699 : vector<8x256xf32>
    %c134 = arith.constant 134 : index
    %701 = memref.load %arg4[%c134] : memref<144xf32, #tpu.memory_space<smem>>
    %702 = vector.broadcast %701 : f32 to vector<8x256xf32>
    %703 = arith.mulf %662, %702 : vector<8x256xf32>
    %704 = arith.addf %700, %703 : vector<8x256xf32>
    %c138 = arith.constant 138 : index
    %705 = memref.load %arg4[%c138] : memref<144xf32, #tpu.memory_space<smem>>
    %706 = vector.broadcast %705 : f32 to vector<8x256xf32>
    %707 = arith.mulf %663, %706 : vector<8x256xf32>
    %708 = arith.addf %704, %707 : vector<8x256xf32>
    %c142 = arith.constant 142 : index
    %709 = memref.load %arg4[%c142] : memref<144xf32, #tpu.memory_space<smem>>
    %710 = vector.broadcast %709 : f32 to vector<8x256xf32>
    %711 = arith.mulf %664, %710 : vector<8x256xf32>
    %712 = arith.addf %708, %711 : vector<8x256xf32>
    %c131 = arith.constant 131 : index
    %713 = memref.load %arg4[%c131] : memref<144xf32, #tpu.memory_space<smem>>
    %714 = vector.broadcast %713 : f32 to vector<8x256xf32>
    %715 = arith.mulf %661, %714 : vector<8x256xf32>
    %716 = arith.addf %656, %715 : vector<8x256xf32>
    %c135 = arith.constant 135 : index
    %717 = memref.load %arg4[%c135] : memref<144xf32, #tpu.memory_space<smem>>
    %718 = vector.broadcast %717 : f32 to vector<8x256xf32>
    %719 = arith.mulf %662, %718 : vector<8x256xf32>
    %720 = arith.addf %716, %719 : vector<8x256xf32>
    %c139 = arith.constant 139 : index
    %721 = memref.load %arg4[%c139] : memref<144xf32, #tpu.memory_space<smem>>
    %722 = vector.broadcast %721 : f32 to vector<8x256xf32>
    %723 = arith.mulf %663, %722 : vector<8x256xf32>
    %724 = arith.addf %720, %723 : vector<8x256xf32>
    %c143 = arith.constant 143 : index
    %725 = memref.load %arg4[%c143] : memref<144xf32, #tpu.memory_space<smem>>
    %726 = vector.broadcast %725 : f32 to vector<8x256xf32>
    %727 = arith.mulf %664, %726 : vector<8x256xf32>
    %728 = arith.addf %724, %727 : vector<8x256xf32>
    %c0_51 = arith.constant 0 : index
    %729 = memref.load %arg5[%c0_51] : memref<4xf32, #tpu.memory_space<smem>>
    %730 = vector.broadcast %729 : f32 to vector<8x256xf32>
    %731 = arith.addf %680, %730 : vector<8x256xf32>
    %cst_52 = arith.constant 0.000000e+00 : f32
    %732 = vector.broadcast %cst_52 : f32 to vector<8x256xf32>
    %733 = arith.maximumf %731, %732 : vector<8x256xf32>
    %c1_53 = arith.constant 1 : index
    %734 = memref.load %arg5[%c1_53] : memref<4xf32, #tpu.memory_space<smem>>
    %735 = vector.broadcast %734 : f32 to vector<8x256xf32>
    %736 = arith.addf %696, %735 : vector<8x256xf32>
    %cst_54 = arith.constant 0.000000e+00 : f32
    %737 = vector.broadcast %cst_54 : f32 to vector<8x256xf32>
    %738 = arith.maximumf %736, %737 : vector<8x256xf32>
    %c2_55 = arith.constant 2 : index
    %739 = memref.load %arg5[%c2_55] : memref<4xf32, #tpu.memory_space<smem>>
    %740 = vector.broadcast %739 : f32 to vector<8x256xf32>
    %741 = arith.addf %712, %740 : vector<8x256xf32>
    %cst_56 = arith.constant 0.000000e+00 : f32
    %742 = vector.broadcast %cst_56 : f32 to vector<8x256xf32>
    %743 = arith.maximumf %741, %742 : vector<8x256xf32>
    %c3_57 = arith.constant 3 : index
    %744 = memref.load %arg5[%c3_57] : memref<4xf32, #tpu.memory_space<smem>>
    %745 = vector.broadcast %744 : f32 to vector<8x256xf32>
    %746 = arith.addf %728, %745 : vector<8x256xf32>
    %cst_58 = arith.constant 0.000000e+00 : f32
    %747 = vector.broadcast %cst_58 : f32 to vector<8x256xf32>
    %748 = arith.maximumf %746, %747 : vector<8x256xf32>
    %c0_59 = arith.constant 0 : index
    %749 = memref.load %arg6[%c0_59] : memref<16xf32, #tpu.memory_space<smem>>
    %750 = vector.broadcast %749 : f32 to vector<8x256xf32>
    %751 = arith.mulf %733, %750 : vector<8x256xf32>
    %c4_60 = arith.constant 4 : index
    %752 = memref.load %arg6[%c4_60] : memref<16xf32, #tpu.memory_space<smem>>
    %753 = vector.broadcast %752 : f32 to vector<8x256xf32>
    %754 = arith.mulf %738, %753 : vector<8x256xf32>
    %755 = arith.addf %751, %754 : vector<8x256xf32>
    %c8_61 = arith.constant 8 : index
    %756 = memref.load %arg6[%c8_61] : memref<16xf32, #tpu.memory_space<smem>>
    %757 = vector.broadcast %756 : f32 to vector<8x256xf32>
    %758 = arith.mulf %743, %757 : vector<8x256xf32>
    %759 = arith.addf %755, %758 : vector<8x256xf32>
    %c12_62 = arith.constant 12 : index
    %760 = memref.load %arg6[%c12_62] : memref<16xf32, #tpu.memory_space<smem>>
    %761 = vector.broadcast %760 : f32 to vector<8x256xf32>
    %762 = arith.mulf %748, %761 : vector<8x256xf32>
    %763 = arith.addf %759, %762 : vector<8x256xf32>
    %c0_63 = arith.constant 0 : index
    %764 = memref.load %arg7[%c0_63] : memref<4xf32, #tpu.memory_space<smem>>
    %765 = vector.broadcast %764 : f32 to vector<8x256xf32>
    %766 = arith.addf %763, %765 : vector<8x256xf32>
    %767 = arith.addf %766, %1 : vector<8x256xf32>
    %cst_64 = arith.constant 0.000000e+00 : f32
    %768 = vector.broadcast %cst_64 : f32 to vector<8x256xf32>
    %769 = arith.maximumf %767, %768 : vector<8x256xf32>
    %c0_65 = arith.constant 0 : index
    %c0_66 = arith.constant 0 : index
    %c0_67 = arith.constant 0 : index
    %770 = vector.load %arg9[%c0_65, %c0_66, %c0_67] : memref<4x8x256xf32, #tpu.memory_space<vmem>>, vector<1x8x256xf32>
    %771 = vector.shape_cast %770 : vector<1x8x256xf32> to vector<8x256xf32>
    %772 = vector.shape_cast %769 : vector<8x256xf32> to vector<1x8x256xf32>
    tpu.vector_store %arg9[%c0_65, %c0_66, %c0_67], %772 {strides = array<i32>} : memref<4x8x256xf32, #tpu.memory_space<vmem>>, vector<1x8x256xf32>,
    %c1_68 = arith.constant 1 : index
    %773 = memref.load %arg6[%c1_68] : memref<16xf32, #tpu.memory_space<smem>>
    %774 = vector.broadcast %773 : f32 to vector<8x256xf32>
    %775 = arith.mulf %733, %774 : vector<8x256xf32>
    %c5_69 = arith.constant 5 : index
    %776 = memref.load %arg6[%c5_69] : memref<16xf32, #tpu.memory_space<smem>>
    %777 = vector.broadcast %776 : f32 to vector<8x256xf32>
    %778 = arith.mulf %738, %777 : vector<8x256xf32>
    %779 = arith.addf %775, %778 : vector<8x256xf32>
    %c9_70 = arith.constant 9 : index
    %780 = memref.load %arg6[%c9_70] : memref<16xf32, #tpu.memory_space<smem>>
    %781 = vector.broadcast %780 : f32 to vector<8x256xf32>
    %782 = arith.mulf %743, %781 : vector<8x256xf32>
    %783 = arith.addf %779, %782 : vector<8x256xf32>
    %c13_71 = arith.constant 13 : index
    %784 = memref.load %arg6[%c13_71] : memref<16xf32, #tpu.memory_space<smem>>
    %785 = vector.broadcast %784 : f32 to vector<8x256xf32>
    %786 = arith.mulf %748, %785 : vector<8x256xf32>
    %787 = arith.addf %783, %786 : vector<8x256xf32>
    %c1_72 = arith.constant 1 : index
    %788 = memref.load %arg7[%c1_72] : memref<4xf32, #tpu.memory_space<smem>>
    %789 = vector.broadcast %788 : f32 to vector<8x256xf32>
    %790 = arith.addf %787, %789 : vector<8x256xf32>
    %791 = arith.addf %790, %3 : vector<8x256xf32>
    %cst_73 = arith.constant 0.000000e+00 : f32
    %792 = vector.broadcast %cst_73 : f32 to vector<8x256xf32>
    %793 = arith.maximumf %791, %792 : vector<8x256xf32>
    %c1_74 = arith.constant 1 : index
    %c0_75 = arith.constant 0 : index
    %c0_76 = arith.constant 0 : index
    %794 = vector.load %arg9[%c1_74, %c0_75, %c0_76] : memref<4x8x256xf32, #tpu.memory_space<vmem>>, vector<1x8x256xf32>
    %795 = vector.shape_cast %794 : vector<1x8x256xf32> to vector<8x256xf32>
    %796 = vector.shape_cast %793 : vector<8x256xf32> to vector<1x8x256xf32>
    tpu.vector_store %arg9[%c1_74, %c0_75, %c0_76], %796 {strides = array<i32>} : memref<4x8x256xf32, #tpu.memory_space<vmem>>, vector<1x8x256xf32>,
    %c2_77 = arith.constant 2 : index
    %797 = memref.load %arg6[%c2_77] : memref<16xf32, #tpu.memory_space<smem>>
    %798 = vector.broadcast %797 : f32 to vector<8x256xf32>
    %799 = arith.mulf %733, %798 : vector<8x256xf32>
    %c6_78 = arith.constant 6 : index
    %800 = memref.load %arg6[%c6_78] : memref<16xf32, #tpu.memory_space<smem>>
    %801 = vector.broadcast %800 : f32 to vector<8x256xf32>
    %802 = arith.mulf %738, %801 : vector<8x256xf32>
    %803 = arith.addf %799, %802 : vector<8x256xf32>
    %c10_79 = arith.constant 10 : index
    %804 = memref.load %arg6[%c10_79] : memref<16xf32, #tpu.memory_space<smem>>
    %805 = vector.broadcast %804 : f32 to vector<8x256xf32>
    %806 = arith.mulf %743, %805 : vector<8x256xf32>
    %807 = arith.addf %803, %806 : vector<8x256xf32>
    %c14_80 = arith.constant 14 : index
    %808 = memref.load %arg6[%c14_80] : memref<16xf32, #tpu.memory_space<smem>>
    %809 = vector.broadcast %808 : f32 to vector<8x256xf32>
    %810 = arith.mulf %748, %809 : vector<8x256xf32>
    %811 = arith.addf %807, %810 : vector<8x256xf32>
    %c2_81 = arith.constant 2 : index
    %812 = memref.load %arg7[%c2_81] : memref<4xf32, #tpu.memory_space<smem>>
    %813 = vector.broadcast %812 : f32 to vector<8x256xf32>
    %814 = arith.addf %811, %813 : vector<8x256xf32>
    %815 = arith.addf %814, %5 : vector<8x256xf32>
    %cst_82 = arith.constant 0.000000e+00 : f32
    %816 = vector.broadcast %cst_82 : f32 to vector<8x256xf32>
    %817 = arith.maximumf %815, %816 : vector<8x256xf32>
    %c2_83 = arith.constant 2 : index
    %c0_84 = arith.constant 0 : index
    %c0_85 = arith.constant 0 : index
    %818 = vector.load %arg9[%c2_83, %c0_84, %c0_85] : memref<4x8x256xf32, #tpu.memory_space<vmem>>, vector<1x8x256xf32>
    %819 = vector.shape_cast %818 : vector<1x8x256xf32> to vector<8x256xf32>
    %820 = vector.shape_cast %817 : vector<8x256xf32> to vector<1x8x256xf32>
    tpu.vector_store %arg9[%c2_83, %c0_84, %c0_85], %820 {strides = array<i32>} : memref<4x8x256xf32, #tpu.memory_space<vmem>>, vector<1x8x256xf32>,
    %c3_86 = arith.constant 3 : index
    %821 = memref.load %arg6[%c3_86] : memref<16xf32, #tpu.memory_space<smem>>
    %822 = vector.broadcast %821 : f32 to vector<8x256xf32>
    %823 = arith.mulf %733, %822 : vector<8x256xf32>
    %c7_87 = arith.constant 7 : index
    %824 = memref.load %arg6[%c7_87] : memref<16xf32, #tpu.memory_space<smem>>
    %825 = vector.broadcast %824 : f32 to vector<8x256xf32>
    %826 = arith.mulf %738, %825 : vector<8x256xf32>
    %827 = arith.addf %823, %826 : vector<8x256xf32>
    %c11_88 = arith.constant 11 : index
    %828 = memref.load %arg6[%c11_88] : memref<16xf32, #tpu.memory_space<smem>>
    %829 = vector.broadcast %828 : f32 to vector<8x256xf32>
    %830 = arith.mulf %743, %829 : vector<8x256xf32>
    %831 = arith.addf %827, %830 : vector<8x256xf32>
    %c15_89 = arith.constant 15 : index
    %832 = memref.load %arg6[%c15_89] : memref<16xf32, #tpu.memory_space<smem>>
    %833 = vector.broadcast %832 : f32 to vector<8x256xf32>
    %834 = arith.mulf %748, %833 : vector<8x256xf32>
    %835 = arith.addf %831, %834 : vector<8x256xf32>
    %c3_90 = arith.constant 3 : index
    %836 = memref.load %arg7[%c3_90] : memref<4xf32, #tpu.memory_space<smem>>
    %837 = vector.broadcast %836 : f32 to vector<8x256xf32>
    %838 = arith.addf %835, %837 : vector<8x256xf32>
    %839 = arith.addf %838, %7 : vector<8x256xf32>
    %cst_91 = arith.constant 0.000000e+00 : f32
    %840 = vector.broadcast %cst_91 : f32 to vector<8x256xf32>
    %841 = arith.maximumf %839, %840 : vector<8x256xf32>
    %c3_92 = arith.constant 3 : index
    %c0_93 = arith.constant 0 : index
    %c0_94 = arith.constant 0 : index
    %842 = vector.load %arg9[%c3_92, %c0_93, %c0_94] : memref<4x8x256xf32, #tpu.memory_space<vmem>>, vector<1x8x256xf32>
    %843 = vector.shape_cast %842 : vector<1x8x256xf32> to vector<8x256xf32>
    %844 = vector.shape_cast %841 : vector<8x256xf32> to vector<1x8x256xf32>
    tpu.vector_store %arg9[%c3_92, %c0_93, %c0_94], %844 {strides = array<i32>} : memref<4x8x256xf32, #tpu.memory_space<vmem>>, vector<1x8x256xf32>,
    return
  }
  func.func @transform_0(%arg0: i32) -> (i32, i32, i32) {
    %c0_i32 = arith.constant 0 : i32
    %c0_i32_0 = arith.constant 0 : i32
    %c0_i32_1 = arith.constant 0 : i32
    return %c0_i32, %arg0, %c0_i32_0 : i32, i32, i32
  }
  func.func @transform_1(%arg0: i32) -> i32 {
    %c0_i32 = arith.constant 0 : i32
    %c0_i32_0 = arith.constant 0 : i32
    return %c0_i32 : i32
  }
  func.func @transform_2(%arg0: i32) -> i32 {
    %c0_i32 = arith.constant 0 : i32
    %c0_i32_0 = arith.constant 0 : i32
    return %c0_i32 : i32
  }
  func.func @transform_3(%arg0: i32) -> i32 {
    %c0_i32 = arith.constant 0 : i32
    %c0_i32_0 = arith.constant 0 : i32
    return %c0_i32 : i32
  }
  func.func @transform_4(%arg0: i32) -> i32 {
    %c0_i32 = arith.constant 0 : i32
    %c0_i32_0 = arith.constant 0 : i32
    return %c0_i32 : i32
  }
  func.func @transform_5(%arg0: i32) -> i32 {
    %c0_i32 = arith.constant 0 : i32
    %c0_i32_0 = arith.constant 0 : i32
    return %c0_i32 : i32
  }
  func.func @transform_6(%arg0: i32) -> i32 {
    %c0_i32 = arith.constant 0 : i32
    %c0_i32_0 = arith.constant 0 : i32
    return %c0_i32 : i32
  }
  func.func @transform_7(%arg0: i32) -> (i32, i32) {
    %c0_i32 = arith.constant 0 : i32
    %c0_i32_0 = arith.constant 0 : i32
    %c0_i32_1 = arith.constant 0 : i32
    return %c0_i32, %c0_i32_0 : i32, i32
  }
  func.func @transform_8(%arg0: i32) -> (i32, i32, i32) {
    %c0_i32 = arith.constant 0 : i32
    %c0_i32_0 = arith.constant 0 : i32
    %c0_i32_1 = arith.constant 0 : i32
    return %c0_i32, %arg0, %c0_i32_0 : i32, i32, i32
  }
}

</mosaic_0001>

<llo_original>
// kernel: tpu_custom_call.1
$region0: #{tpu_custom_call.1}
  #allocation0 [shape = 'u32[]', space=smem, size = 0x4, offset = 0x4, fixed_abs, tag = 'smem constant byte address 0x4 - core index']
  #allocation1 [shape = 'u32[72,128]{1,0:T(1,128)}', space=vmem, size = 0x9000, scoped, tag = 'internal scratch']
  %s0 = inlined_call_operand.hbm [shape: f32[4,8,256], index: 0, kind: input, shape index: {}]
  %s1 = inlined_call_operand.hbm [shape: f32[16], index: 1, kind: input, shape index: {}]
  %s2 = inlined_call_operand.hbm [shape: f32[4], index: 2, kind: input, shape index: {}]
  %s3 = inlined_call_operand.vmem [shape: f32[144], index: 3, kind: input, shape index: {}]
  %s4 = inlined_call_operand.vmem [shape: f32[4], index: 4, kind: input, shape index: {}]
  %s5 = inlined_call_operand.vmem [shape: f32[16], index: 5, kind: input, shape index: {}]
  %s6 = inlined_call_operand.vmem [shape: f32[4], index: 6, kind: input, shape index: {}]
  %s7 = inlined_call_operand.hbm [shape: f32[9,256], index: 7, kind: input, shape index: {}]
  %s8 = inlined_call_operand.hbm [shape: f32[4,8,256], index: 8, kind: output, shape index: {}]
  %s9 = sld [smem:[#allocation0]]
  $region74: #{tpu_custom_call.1} parent=0
    _
  %s11 = ssub.s32 1, %s9
  %s12 = scalar_select 0, %s11, %s9
  $region1: #{tpu_custom_call.1} parent=0
    #allocation2 [shape = 'u8[32768]{0}', space=vmem, size = 0x8000, scoped, tag = 'input window, operand 0, single buffered']
    #allocation3 [shape = 's32[1]{0}', space=sflag, size = 0x4, scoped, tag = 'scoped memory for tpu_custom_call.1']
    #allocation4 [shape = 's32[1]{0}', space=sflag, size = 0x4, scoped, tag = 'scoped memory for tpu_custom_call.1']
    #allocation5 [shape = 's32[1]{0}', space=sflag, size = 0x4, scoped, tag = 'scoped memory for tpu_custom_call.1']
    #allocation6 [shape = 's32[1]{0}', space=sflag, size = 0x4, scoped, tag = 'scoped memory for tpu_custom_call.1']
    #allocation7 [shape = 'u8[512]{0}', space=smem, size = 0x200, scoped, tag = 'input window, operand 1, single buffered']
    #allocation8 [shape = 'u8[512]{0}', space=smem, size = 0x200, scoped, tag = 'input window, operand 2, single buffered']
    #allocation9 [shape = 's32[1]{0}', space=sflag, size = 0x4, scoped, tag = 'scoped memory for tpu_custom_call.1']
    #allocation10 [shape = 'u8[1024]{0}', space=smem, size = 0x400, scoped, tag = 'input window, operand 3, single buffered']
    #allocation11 [shape = 'u8[512]{0}', space=smem, size = 0x200, scoped, tag = 'input window, operand 4, single buffered']
    #allocation12 [shape = 's32[1]{0}', space=sflag, size = 0x4, scoped, tag = 'scoped memory for tpu_custom_call.1']
    #allocation13 [shape = 'u8[512]{0}', space=smem, size = 0x200, scoped, tag = 'input window, operand 5, single buffered']
    #allocation14 [shape = 'u8[512]{0}', space=smem, size = 0x200, scoped, tag = 'input window, operand 6, single buffered']
    #allocation15 [shape = 's32[1]{0}', space=sflag, size = 0x4, scoped, tag = 'scoped memory for tpu_custom_call.1']
    #allocation16 [shape = 'u8[16384]{0}', space=vmem, size = 0x4000, scoped, tag = 'input window, operand 7, single buffered']
    #allocation17 [shape = 's32[1]{0}', space=sflag, size = 0x4, scoped, tag = 'scoped memory for tpu_custom_call.1']
    #allocation18 [shape = 'u8[32768]{0}', space=vmem, size = 0x8000, scoped, tag = 'output window, operand 0, single buffered']
    %13 = vsyncpa [#allocation3], 0
    %14 = vsyncpa [#allocation5], 0
    %15 = vsyncpa [#allocation9], 0
    %16 = vsyncpa [#allocation6], 0
    %17 = vsyncpa [#allocation12], 0
    %18 = vsyncpa [#allocation15], 0
    %19 = vsyncpa [#allocation17], 0
    %20 = vsyncpa [#allocation4], 0
    // Predicated region
    $region2: #{tpu_custom_call.1} parent=1 // pred_check
      _
    $region3: #{tpu_custom_call.1} parent=1 // pred_check_branch
      %22 = sbr.rel (0) target = $region5
    $region4: #{tpu_custom_call.1} parent=1 // pred_region
      %24 = vsyncadd [#allocation3], 0
      %s25 = sshll.u32 %s0, 4
      %s26 = int_to_ptr.hbm [resolvable:$true] %s25
      %s27 = sshll.u32 [#allocation2], 4
      %s28 = int_to_ptr.vmem [resolvable:$true] %s27
      %33 = dma.hbm_to_vmem [thread:$0]  %s26, 1024, %s28, [#allocation3], 256, 256, 16
    $region5: #{tpu_custom_call.1} parent=1 // pred_fallthru
      _
    // Predicated region
    $region6: #{tpu_custom_call.1} parent=1 // pred_check
      _
    $region7: #{tpu_custom_call.1} parent=1 // pred_check_branch
      %35 = sbr.rel (0) target = $region9
    $region8: #{tpu_custom_call.1} parent=1 // pred_region
      %37 = vsyncadd [#allocation5], 0
      %s39 = sshll.u32 %s1, 4
      %s40 = int_to_ptr.hbm [resolvable:$true] %s39
      %42 = dma.hbm_to_smem %s40, 16, [#allocation7], [#allocation5]
    $region9: #{tpu_custom_call.1} parent=1 // pred_fallthru
      _
    // Predicated region
    $region10: #{tpu_custom_call.1} parent=1 // pred_check
      _
    $region11: #{tpu_custom_call.1} parent=1 // pred_check_branch
      %44 = sbr.rel (0) target = $region13
    $region12: #{tpu_custom_call.1} parent=1 // pred_region
      %46 = vsyncadd [#allocation9], 0
      %s48 = sshll.u32 %s2, 4
      %s49 = int_to_ptr.hbm [resolvable:$true] %s48
      %51 = dma.hbm_to_smem %s49, 16, [#allocation8], [#allocation9]
    $region13: #{tpu_custom_call.1} parent=1 // pred_fallthru
      _
    // Predicated region
    $region14: #{tpu_custom_call.1} parent=1 // pred_check
      _
    $region15: #{tpu_custom_call.1} parent=1 // pred_check_branch
      %53 = sbr.rel (0) target = $region17
    $region16: #{tpu_custom_call.1} parent=1 // pred_region
      %55 = vsyncadd [#allocation6], 0
      %s57 = sshll.u32 %s3, 4
      %s58 = int_to_ptr.vmem [resolvable:$true] %s57
      %60 = dma.vmem_to_smem %s58, 32, [#allocation10], [#allocation6]
    $region17: #{tpu_custom_call.1} parent=1 // pred_fallthru
      _
    // Predicated region
    $region18: #{tpu_custom_call.1} parent=1 // pred_check
      _
    $region19: #{tpu_custom_call.1} parent=1 // pred_check_branch
      %62 = sbr.rel (0) target = $region21
    $region20: #{tpu_custom_call.1} parent=1 // pred_region
      %64 = vsyncadd [#allocation12], 0
      %s66 = sshll.u32 %s4, 4
      %s67 = int_to_ptr.vmem [resolvable:$true] %s66
      %69 = dma.vmem_to_smem %s67, 16, [#allocation11], [#allocation12]
    $region21: #{tpu_custom_call.1} parent=1 // pred_fallthru
      _
    // Predicated region
    $region22: #{tpu_custom_call.1} parent=1 // pred_check
      _
    $region23: #{tpu_custom_call.1} parent=1 // pred_check_branch
      %71 = sbr.rel (0) target = $region25
    $region24: #{tpu_custom_call.1} parent=1 // pred_region
      %73 = vsyncadd [#allocation12], 0
      %s75 = sshll.u32 %s5, 4
      %s76 = int_to_ptr.vmem [resolvable:$true] %s75
      %78 = dma.vmem_to_smem %s76, 16, [#allocation13], [#allocation12]
    $region25: #{tpu_custom_call.1} parent=1 // pred_fallthru
      _
    // Predicated region
    $region26: #{tpu_custom_call.1} parent=1 // pred_check
      _
    $region27: #{tpu_custom_call.1} parent=1 // pred_check_branch
      %80 = sbr.rel (0) target = $region29
    $region28: #{tpu_custom_call.1} parent=1 // pred_region
      %82 = vsyncadd [#allocation15], 0
      %s84 = sshll.u32 %s6, 4
      %s85 = int_to_ptr.vmem [resolvable:$true] %s84
      %87 = dma.vmem_to_smem %s85, 16, [#allocation14], [#allocation15]
    $region29: #{tpu_custom_call.1} parent=1 // pred_fallthru
      _
    // Predicated region
    $region30: #{tpu_custom_call.1} parent=1 // pred_check
      _
    $region31: #{tpu_custom_call.1} parent=1 // pred_check_branch
      %89 = sbr.rel (0) target = $region33
    $region32: #{tpu_custom_call.1} parent=1 // pred_region
      %91 = vsyncadd [#allocation17], 0
      %s92 = sshll.u32 %s7, 4
      %s93 = int_to_ptr.hbm [resolvable:$true] %s92
      %s94 = sshll.u32 [#allocation16], 4
      %s95 = int_to_ptr.vmem [resolvable:$true] %s94
      %100 = dma.hbm_to_vmem [thread:$0]  %s93, 512, %s95, [#allocation17], 256, 256, 16
    $region33: #{tpu_custom_call.1} parent=1 // pred_fallthru
      _
    // Predicated region
    $region34: #{tpu_custom_call.1} parent=1 // pred_check
      _
    $region35: #{tpu_custom_call.1} parent=1 // pred_check_branch
      %102 = sbr.rel (0) target = $region37
    $region36: #{tpu_custom_call.1} parent=1 // pred_region
      %104 = dma.done [#allocation3], 1024
    $region37: #{tpu_custom_call.1} parent=1 // pred_fallthru
      _
    // Predicated region
    $region38: #{tpu_custom_call.1} parent=1 // pred_check
      _
    $region39: #{tpu_custom_call.1} parent=1 // pred_check_branch
      %106 = sbr.rel (0) target = $region41
    $region40: #{tpu_custom_call.1} parent=1 // pred_region
      %108 = dma.done [#allocation5], 16
    $region41: #{tpu_custom_call.1} parent=1 // pred_fallthru
      _
    // Predicated region
    $region42: #{tpu_custom_call.1} parent=1 // pred_check
      _
    $region43: #{tpu_custom_call.1} parent=1 // pred_check_branch
      %110 = sbr.rel (0) target = $region45
    $region44: #{tpu_custom_call.1} parent=1 // pred_region
      %112 = dma.done [#allocation9], 16
    $region45: #{tpu_custom_call.1} parent=1 // pred_fallthru
      _
    // Predicated region
    $region46: #{tpu_custom_call.1} parent=1 // pred_check
      _
    $region47: #{tpu_custom_call.1} parent=1 // pred_check_branch
      %114 = sbr.rel (0) target = $region49
    $region48: #{tpu_custom_call.1} parent=1 // pred_region
      %116 = dma.done [#allocation6], 32
    $region49: #{tpu_custom_call.1} parent=1 // pred_fallthru
      _
    // Predicated region
    $region50: #{tpu_custom_call.1} parent=1 // pred_check
      _
    $region51: #{tpu_custom_call.1} parent=1 // pred_check_branch
      %118 = sbr.rel (0) target = $region53
    $region52: #{tpu_custom_call.1} parent=1 // pred_region
      %120 = dma.done [#allocation12], 16
    $region53: #{tpu_custom_call.1} parent=1 // pred_fallthru
      _
    // Predicated region
    $region54: #{tpu_custom_call.1} parent=1 // pred_check
      _
    $region55: #{tpu_custom_call.1} parent=1 // pred_check_branch
      %122 = sbr.rel (0) target = $region57
    $region56: #{tpu_custom_call.1} parent=1 // pred_region
      %124 = dma.done [#allocation12], 16
    $region57: #{tpu_custom_call.1} parent=1 // pred_fallthru
      _
    // Predicated region
    $region58: #{tpu_custom_call.1} parent=1 // pred_check
      _
    $region59: #{tpu_custom_call.1} parent=1 // pred_check_branch
      %126 = sbr.rel (0) target = $region61
    $region60: #{tpu_custom_call.1} parent=1 // pred_region
      %128 = dma.done [#allocation15], 16
    $region61: #{tpu_custom_call.1} parent=1 // pred_fallthru
      _
    // Predicated region
    $region62: #{tpu_custom_call.1} parent=1 // pred_check
      _
    $region63: #{tpu_custom_call.1} parent=1 // pred_check_branch
      %130 = sbr.rel (0) target = $region65
    $region64: #{tpu_custom_call.1} parent=1 // pred_region
      %132 = dma.done [#allocation17], 512
    $region65: #{tpu_custom_call.1} parent=1 // pred_fallthru
      _
    %133 = sfence
    %v134 = vld [vmem:[#allocation2] sm:$0xff]
    %v135 = vld [vmem:[#allocation2 + $0x8] sm:$0xff]
    %s136 = scalar_lea.vmem [#allocation2], 16
    %v137 = vld [vmem:[%s136] sm:$0xff]
    %v138 = vld [vmem:[%s136 + $0x8] sm:$0xff]
    %s139 = scalar_lea.vmem [#allocation2], 32
    %v140 = vld [vmem:[%s139] sm:$0xff]
    %v141 = vld [vmem:[%s139 + $0x8] sm:$0xff]
    %s142 = scalar_lea.vmem [#allocation2], 48
    %v143 = vld [vmem:[%s142] sm:$0xff]
    %v144 = vld [vmem:[%s142 + $0x8] sm:$0xff]
    %s145 = sld [smem:[#allocation7]]
    %v146 = vstv %s145
    %v147 = vmul.f32 %v134, %v146
    %v148 = vmul.f32 %v135, %v146
    %s149 = sld [smem:[#allocation7 + $0x4]]
    %v150 = vstv %s149
    %v151 = vmul.f32 %v137, %v150
    %v152 = vmul.f32 %v138, %v150
    %v153 = vadd.f32 %v147, %v151
    %v154 = vadd.f32 %v148, %v152
    %s155 = sld [smem:[#allocation7 + $0x8]]
    %v156 = vstv %s155
    %v157 = vmul.f32 %v140, %v156
    %v158 = vmul.f32 %v141, %v156
    %v159 = vadd.f32 %v153, %v157
    %v160 = vadd.f32 %v154, %v158
    %s161 = sld [smem:[#allocation7 + $0xc]]
    %v162 = vstv %s161
    %v163 = vmul.f32 %v143, %v162
    %v164 = vmul.f32 %v144, %v162
    %v165 = vadd.f32 %v159, %v163
    %v166 = vadd.f32 %v160, %v164
    %s167 = sld [smem:[#allocation8]]
    %v168 = vstv %s167
    %v169 = vadd.f32 %v165, %v168
    %v170 = vadd.f32 %v166, %v168
    %v171 = vmax.f32 %v169, 0.0
    %v172 = vmax.f32 %v170, 0.0
    %s173 = sld [smem:[#allocation7 + $0x1]]
    %v174 = vstv %s173
    %v175 = vmul.f32 %v134, %v174
    %v176 = vmul.f32 %v135, %v174
    %s177 = sld [smem:[#allocation7 + $0x5]]
    %v178 = vstv %s177
    %v179 = vmul.f32 %v137, %v178
    %v180 = vmul.f32 %v138, %v178
    %v181 = vadd.f32 %v175, %v179
    %v182 = vadd.f32 %v176, %v180
    %s183 = sld [smem:[#allocation7 + $0x9]]
    %v184 = vstv %s183
    %v185 = vmul.f32 %v140, %v184
    %v186 = vmul.f32 %v141, %v184
    %v187 = vadd.f32 %v181, %v185
    %v188 = vadd.f32 %v182, %v186
    %s189 = sld [smem:[#allocation7 + $0xd]]
    %v190 = vstv %s189
    %v191 = vmul.f32 %v143, %v190
    %v192 = vmul.f32 %v144, %v190
    %v193 = vadd.f32 %v187, %v191
    %v194 = vadd.f32 %v188, %v192
    %s195 = sld [smem:[#allocation8 + $0x1]]
    %v196 = vstv %s195
    %v197 = vadd.f32 %v193, %v196
    %v198 = vadd.f32 %v194, %v196
    %v199 = vmax.f32 %v197, 0.0
    %v200 = vmax.f32 %v198, 0.0
    %s201 = sld [smem:[#allocation7 + $0x2]]
    %v202 = vstv %s201
    %v203 = vmul.f32 %v134, %v202
    %v204 = vmul.f32 %v135, %v202
    %s205 = sld [smem:[#allocation7 + $0x6]]
    %v206 = vstv %s205
    %v207 = vmul.f32 %v137, %v206
    %v208 = vmul.f32 %v138, %v206
    %v209 = vadd.f32 %v203, %v207
    %v210 = vadd.f32 %v204, %v208
    %s211 = sld [smem:[#allocation7 + $0xa]]
    %v212 = vstv %s211
    %v213 = vmul.f32 %v140, %v212
    %v214 = vmul.f32 %v141, %v212
    %v215 = vadd.f32 %v209, %v213
    %v216 = vadd.f32 %v210, %v214
    %s217 = sld [smem:[#allocation7 + $0xe]]
    %v218 = vstv %s217
    %v219 = vmul.f32 %v143, %v218
    %v220 = vmul.f32 %v144, %v218
    %v221 = vadd.f32 %v215, %v219
    %v222 = vadd.f32 %v216, %v220
    %s223 = sld [smem:[#allocation8 + $0x2]]
    %v224 = vstv %s223
    %v225 = vadd.f32 %v221, %v224
    %v226 = vadd.f32 %v222, %v224
    %v227 = vmax.f32 %v225, 0.0
    %v228 = vmax.f32 %v226, 0.0
    %s229 = sld [smem:[#allocation7 + $0x3]]
    %v230 = vstv %s229
    %v231 = vmul.f32 %v134, %v230
    %v232 = vmul.f32 %v135, %v230
    %s233 = sld [smem:[#allocation7 + $0x7]]
    %v234 = vstv %s233
    %v235 = vmul.f32 %v137, %v234
    %v236 = vmul.f32 %v138, %v234
    %v237 = vadd.f32 %v231, %v235
    %v238 = vadd.f32 %v232, %v236
    %s239 = sld [smem:[#allocation7 + $0xb]]
    %v240 = vstv %s239
    %v241 = vmul.f32 %v140, %v240
    %v242 = vmul.f32 %v141, %v240
    %v243 = vadd.f32 %v237, %v241
    %v244 = vadd.f32 %v238, %v242
    %s245 = sld [smem:[#allocation7 + $0xf]]
    %v246 = vstv %s245
    %v247 = vmul.f32 %v143, %v246
    %v248 = vmul.f32 %v144, %v246
    %v249 = vadd.f32 %v243, %v247
    %v250 = vadd.f32 %v244, %v248
    %s251 = sld [smem:[#allocation8 + $0x3]]
    %v252 = vstv %s251
    %v253 = vadd.f32 %v249, %v252
    %v254 = vadd.f32 %v250, %v252
    %v255 = vmax.f32 %v253, 0.0
    %v256 = vmax.f32 %v254, 0.0
    %257 = vrot.lane.b32.xlu0 %v171, 17
    %v258 = vpop.permute.xlu0 %257
    %259 = vrot.lane.b32.xlu0 %v199, 17
    %v260 = vpop.permute.xlu0 %259
    %261 = vrot.lane.b32.xlu0 %v227, 17
    %v262 = vpop.permute.xlu0 %261
    %263 = vrot.lane.b32.xlu0 %v255, 17
    %v264 = vpop.permute.xlu0 %263
    %265 = vrot.lane.b32.xlu0 %v172, 17
    %v266 = vpop.permute.xlu0 %265
    %267 = vrot.lane.b32.xlu0 %v200, 17
    %v268 = vpop.permute.xlu0 %267
    %269 = vrot.lane.b32.xlu0 %v228, 17
    %v270 = vpop.permute.xlu0 %269
    %271 = vrot.lane.b32.xlu0 %v256, 17
    %v272 = vpop.permute.xlu0 %271
    %v273 = vlaneseq
    %v274 = vand.u32 %v273, 127
    %vm275 = vcmp.lt.s32.totalorder %v274, 17
    %v276 = vsel %vm275, %v258, %v266
    %v277 = vsel %vm275, %v260, %v268
    %v278 = vsel %vm275, %v262, %v270
    %v279 = vsel %vm275, %v264, %v272
    %v280 = vsel %vm275, %v266, %v258
    %v281 = vsel %vm275, %v268, %v260
    %v282 = vsel %vm275, %v270, %v262
    %v283 = vsel %vm275, %v272, %v264
    %v284 = vld [vmem:[#allocation16] ss:$8 sm:$0x3]
    %v286 = vperm.slane %v284, 0
    %v287 = vperm.slane %v284, 1
    %v290 = vmul.f32 %v280, %v286
    %v291 = vmul.f32 %v276, %v287
    %v292 = vmul.f32 %v281, %v286
    %v293 = vmul.f32 %v277, %v287
    %v294 = vmul.f32 %v282, %v286
    %v295 = vmul.f32 %v278, %v287
    %v296 = vmul.f32 %v283, %v286
    %v297 = vmul.f32 %v279, %v287
    %s298 = sld [smem:[#allocation10]]
    %v299 = vstv %s298
    %v300 = vmul.f32 %v290, %v299
    %v301 = vmul.f32 %v291, %v299
    %s302 = sld [smem:[#allocation10 + $0x4]]
    %v303 = vstv %s302
    %v304 = vmul.f32 %v292, %v303
    %v305 = vmul.f32 %v293, %v303
    %v306 = vadd.f32 %v300, %v304
    %v307 = vadd.f32 %v301, %v305
    %s308 = sld [smem:[#allocation10 + $0x8]]
    %v309 = vstv %s308
    %v310 = vmul.f32 %v294, %v309
    %v311 = vmul.f32 %v295, %v309
    %v312 = vadd.f32 %v306, %v310
    %v313 = vadd.f32 %v307, %v311
    %s314 = sld [smem:[#allocation10 + $0xc]]
    %v315 = vstv %s314
    %v316 = vmul.f32 %v296, %v315
    %v317 = vmul.f32 %v297, %v315
    %v318 = vadd.f32 %v312, %v316
    %v319 = vadd.f32 %v313, %v317
    %s320 = sld [smem:[#allocation10 + $0x1]]
    %v321 = vstv %s320
    %v322 = vmul.f32 %v290, %v321
    %v323 = vmul.f32 %v291, %v321
    %s324 = sld [smem:[#allocation10 + $0x5]]
    %v325 = vstv %s324
    %v326 = vmul.f32 %v292, %v325
    %v327 = vmul.f32 %v293, %v325
    %v328 = vadd.f32 %v322, %v326
    %v329 = vadd.f32 %v323, %v327
    %s330 = sld [smem:[#allocation10 + $0x9]]
    %v331 = vstv %s330
    %v332 = vmul.f32 %v294, %v331
    %v333 = vmul.f32 %v295, %v331
    %v334 = vadd.f32 %v328, %v332
    %v335 = vadd.f32 %v329, %v333
    %s336 = sld [smem:[#allocation10 + $0xd]]
    %v337 = vstv %s336
    %v338 = vmul.f32 %v296, %v337
    %v339 = vmul.f32 %v297, %v337
    %v340 = vadd.f32 %v334, %v338
    %v341 = vadd.f32 %v335, %v339
    %s342 = sld [smem:[#allocation10 + $0x2]]
    %v343 = vstv %s342
    %v344 = vmul.f32 %v290, %v343
    %v345 = vmul.f32 %v291, %v343
    %s346 = sld [smem:[#allocation10 + $0x6]]
    %v347 = vstv %s346
    %v348 = vmul.f32 %v292, %v347
    %v349 = vmul.f32 %v293, %v347
    %v350 = vadd.f32 %v344, %v348
    %v351 = vadd.f32 %v345, %v349
    %s352 = sld [smem:[#allocation10 + $0xa]]
    %v353 = vstv %s352
    %v354 = vmul.f32 %v294, %v353
    %v355 = vmul.f32 %v295, %v353
    %v356 = vadd.f32 %v350, %v354
    %v357 = vadd.f32 %v351, %v355
    %s358 = sld [smem:[#allocation10 + $0xe]]
    %v359 = vstv %s358
    %v360 = vmul.f32 %v296, %v359
    %v361 = vmul.f32 %v297, %v359
    %v362 = vadd.f32 %v356, %v360
    %v363 = vadd.f32 %v357, %v361
    %s364 = sld [smem:[#allocation10 + $0x3]]
    %v365 = vstv %s364
    %v366 = vmul.f32 %v290, %v365
    %v367 = vmul.f32 %v291, %v365
    %s368 = sld [smem:[#allocation10 + $0x7]]
    %v369 = vstv %s368
    %v370 = vmul.f32 %v292, %v369
    %v371 = vmul.f32 %v293, %v369
    %v372 = vadd.f32 %v366, %v370
    %v373 = vadd.f32 %v367, %v371
    %s374 = sld [smem:[#allocation10 + $0xb]]
    %v375 = vstv %s374
    %v376 = vmul.f32 %v294, %v375
    %v377 = vmul.f32 %v295, %v375
    %v378 = vadd.f32 %v372, %v376
    %v379 = vadd.f32 %v373, %v377
    %s380 = sld [smem:[#allocation10 + $0xf]]
    %v381 = vstv %s380
    %v382 = vmul.f32 %v296, %v381
    %v383 = vmul.f32 %v297, %v381
    %v384 = vadd.f32 %v378, %v382
    %v385 = vadd.f32 %v379, %v383
    %386 = vrot.lane.b32.xlu0 %v171, 16
    %v387 = vpop.permute.xlu0 %386
    %388 = vrot.lane.b32.xlu0 %v199, 16
    %v389 = vpop.permute.xlu0 %388
    %390 = vrot.lane.b32.xlu0 %v227, 16
    %v391 = vpop.permute.xlu0 %390
    %392 = vrot.lane.b32.xlu0 %v255, 16
    %v393 = vpop.permute.xlu0 %392
    %394 = vrot.lane.b32.xlu0 %v172, 16
    %v395 = vpop.permute.xlu0 %394
    %396 = vrot.lane.b32.xlu0 %v200, 16
    %v397 = vpop.permute.xlu0 %396
    %398 = vrot.lane.b32.xlu0 %v228, 16
    %v399 = vpop.permute.xlu0 %398
    %400 = vrot.lane.b32.xlu0 %v256, 16
    %v401 = vpop.permute.xlu0 %400
    %vm402 = vcmp.lt.s32.totalorder %v274, 16
    %v403 = vsel %vm402, %v387, %v395
    %v404 = vsel %vm402, %v389, %v397
    %v405 = vsel %vm402, %v391, %v399
    %v406 = vsel %vm402, %v393, %v401
    %v407 = vsel %vm402, %v395, %v387
    %v408 = vsel %vm402, %v397, %v389
    %v409 = vsel %vm402, %v399, %v391
    %v410 = vsel %vm402, %v401, %v393
    %s411 = scalar_lea.vmem [#allocation16], 1
    %v412 = vld [vmem:[%s411] ss:$8 sm:$0x3]
    %v414 = vperm.slane %v412, 0
    %v415 = vperm.slane %v412, 1
    %v418 = vmul.f32 %v407, %v414
    %v419 = vmul.f32 %v403, %v415
    %v420 = vmul.f32 %v408, %v414
    %v421 = vmul.f32 %v404, %v415
    %v422 = vmul.f32 %v409, %v414
    %v423 = vmul.f32 %v405, %v415
    %v424 = vmul.f32 %v410, %v414
    %v425 = vmul.f32 %v406, %v415
    %s426 = sld [smem:[#allocation10 + $0x10]]
    %v427 = vstv %s426
    %v428 = vmul.f32 %v418, %v427
    %v429 = vmul.f32 %v419, %v427
    %v430 = vadd.f32 %v318, %v428
    %v431 = vadd.f32 %v319, %v429
    %s432 = sld [smem:[#allocation10 + $0x14]]
    %v433 = vstv %s432
    %v434 = vmul.f32 %v420, %v433
    %v435 = vmul.f32 %v421, %v433
    %v436 = vadd.f32 %v430, %v434
    %v437 = vadd.f32 %v431, %v435
    %s438 = sld [smem:[#allocation10 + $0x18]]
    %v439 = vstv %s438
    %v440 = vmul.f32 %v422, %v439
    %v441 = vmul.f32 %v423, %v439
    %v442 = vadd.f32 %v436, %v440
    %v443 = vadd.f32 %v437, %v441
    %s444 = sld [smem:[#allocation10 + $0x1c]]
    %v445 = vstv %s444
    %v446 = vmul.f32 %v424, %v445
    %v447 = vmul.f32 %v425, %v445
    %v448 = vadd.f32 %v442, %v446
    %v449 = vadd.f32 %v443, %v447
    %s450 = sld [smem:[#allocation10 + $0x11]]
    %v451 = vstv %s450
    %v452 = vmul.f32 %v418, %v451
    %v453 = vmul.f32 %v419, %v451
    %v454 = vadd.f32 %v340, %v452
    %v455 = vadd.f32 %v341, %v453
    %s456 = sld [smem:[#allocation10 + $0x15]]
    %v457 = vstv %s456
    %v458 = vmul.f32 %v420, %v457
    %v459 = vmul.f32 %v421, %v457
    %v460 = vadd.f32 %v454, %v458
    %v461 = vadd.f32 %v455, %v459
    %s462 = sld [smem:[#allocation10 + $0x19]]
    %v463 = vstv %s462
    %v464 = vmul.f32 %v422, %v463
    %v465 = vmul.f32 %v423, %v463
    %v466 = vadd.f32 %v460, %v464
    %v467 = vadd.f32 %v461, %v465
    %s468 = sld [smem:[#allocation10 + $0x1d]]
    %v469 = vstv %s468
    %v470 = vmul.f32 %v424, %v469
    %v471 = vmul.f32 %v425, %v469
    %v472 = vadd.f32 %v466, %v470
    %v473 = vadd.f32 %v467, %v471
    %s474 = sld [smem:[#allocation10 + $0x12]]
    %v475 = vstv %s474
    %v476 = vmul.f32 %v418, %v475
    %v477 = vmul.f32 %v419, %v475
    %v478 = vadd.f32 %v362, %v476
    %v479 = vadd.f32 %v363, %v477
    %s480 = sld [smem:[#allocation10 + $0x16]]
    %v481 = vstv %s480
    %v482 = vmul.f32 %v420, %v481
    %v483 = vmul.f32 %v421, %v481
    %v484 = vadd.f32 %v478, %v482
    %v485 = vadd.f32 %v479, %v483
    %s486 = sld [smem:[#allocation10 + $0x1a]]
    %v487 = vstv %s486
    %v488 = vmul.f32 %v422, %v487
    %v489 = vmul.f32 %v423, %v487
    %v490 = vadd.f32 %v484, %v488
    %v491 = vadd.f32 %v485, %v489
    %s492 = sld [smem:[#allocation10 + $0x1e]]
    %v493 = vstv %s492
    %v494 = vmul.f32 %v424, %v493
    %v495 = vmul.f32 %v425, %v493
    %v496 = vadd.f32 %v490, %v494
    %v497 = vadd.f32 %v491, %v495
    %s498 = sld [smem:[#allocation10 + $0x13]]
    %v499 = vstv %s498
    %v500 = vmul.f32 %v418, %v499
    %v501 = vmul.f32 %v419, %v499
    %v502 = vadd.f32 %v384, %v500
    %v503 = vadd.f32 %v385, %v501
    %s504 = sld [smem:[#allocation10 + $0x17]]
    %v505 = vstv %s504
    %v506 = vmul.f32 %v420, %v505
    %v507 = vmul.f32 %v421, %v505
    %v508 = vadd.f32 %v502, %v506
    %v509 = vadd.f32 %v503, %v507
    %s510 = sld [smem:[#allocation10 + $0x1b]]
    %v511 = vstv %s510
    %v512 = vmul.f32 %v422, %v511
    %v513 = vmul.f32 %v423, %v511
    %v514 = vadd.f32 %v508, %v512
    %v515 = vadd.f32 %v509, %v513
    %s516 = sld [smem:[#allocation10 + $0x1f]]
    %v517 = vstv %s516
    %v518 = vmul.f32 %v424, %v517
    %v519 = vmul.f32 %v425, %v517
    %v520 = vadd.f32 %v514, %v518
    %v521 = vadd.f32 %v515, %v519
    %522 = vrot.lane.b32.xlu0 %v171, 15
    %v523 = vpop.permute.xlu0 %522
    %524 = vrot.lane.b32.xlu0 %v199, 15
    %v525 = vpop.permute.xlu0 %524
    %526 = vrot.lane.b32.xlu0 %v227, 15
    %v527 = vpop.permute.xlu0 %526
    %528 = vrot.lane.b32.xlu0 %v255, 15
    %v529 = vpop.permute.xlu0 %528
    %530 = vrot.lane.b32.xlu0 %v172, 15
    %v531 = vpop.permute.xlu0 %530
    %532 = vrot.lane.b32.xlu0 %v200, 15
    %v533 = vpop.permute.xlu0 %532
    %534 = vrot.lane.b32.xlu0 %v228, 15
    %v535 = vpop.permute.xlu0 %534
    %536 = vrot.lane.b32.xlu0 %v256, 15
    %v537 = vpop.permute.xlu0 %536
    %vm538 = vcmp.lt.s32.totalorder %v274, 15
    %v539 = vsel %vm538, %v523, %v531
    %v540 = vsel %vm538, %v525, %v533
    %v541 = vsel %vm538, %v527, %v535
    %v542 = vsel %vm538, %v529, %v537
    %v543 = vsel %vm538, %v531, %v523
    %v544 = vsel %vm538, %v533, %v525
    %v545 = vsel %vm538, %v535, %v527
    %v546 = vsel %vm538, %v537, %v529
    %s547 = scalar_lea.vmem [#allocation16], 2
    %v548 = vld [vmem:[%s547] ss:$8 sm:$0x3]
    %v550 = vperm.slane %v548, 0
    %v551 = vperm.slane %v548, 1
    %v554 = vmul.f32 %v543, %v550
    %v555 = vmul.f32 %v539, %v551
    %v556 = vmul.f32 %v544, %v550
    %v557 = vmul.f32 %v540, %v551
    %v558 = vmul.f32 %v545, %v550
    %v559 = vmul.f32 %v541, %v551
    %v560 = vmul.f32 %v546, %v550
    %v561 = vmul.f32 %v542, %v551
    %s562 = sld [smem:[#allocation10 + $0x20]]
    %v563 = vstv %s562
    %v564 = vmul.f32 %v554, %v563
    %v565 = vmul.f32 %v555, %v563
    %v566 = vadd.f32 %v448, %v564
    %v567 = vadd.f32 %v449, %v565
    %s568 = sld [smem:[#allocation10 + $0x24]]
    %v569 = vstv %s568
    %v570 = vmul.f32 %v556, %v569
    %v571 = vmul.f32 %v557, %v569
    %v572 = vadd.f32 %v566, %v570
    %v573 = vadd.f32 %v567, %v571
    %s574 = sld [smem:[#allocation10 + $0x28]]
    %v575 = vstv %s574
    %v576 = vmul.f32 %v558, %v575
    %v577 = vmul.f32 %v559, %v575
    %v578 = vadd.f32 %v572, %v576
    %v579 = vadd.f32 %v573, %v577
    %s580 = sld [smem:[#allocation10 + $0x2c]]
    %v581 = vstv %s580
    %v582 = vmul.f32 %v560, %v581
    %v583 = vmul.f32 %v561, %v581
    %v584 = vadd.f32 %v578, %v582
    %v585 = vadd.f32 %v579, %v583
    %s586 = sld [smem:[#allocation10 + $0x21]]
    %v587 = vstv %s586
    %v588 = vmul.f32 %v554, %v587
    %v589 = vmul.f32 %v555, %v587
    %v590 = vadd.f32 %v472, %v588
    %v591 = vadd.f32 %v473, %v589
    %s592 = sld [smem:[#allocation10 + $0x25]]
    %v593 = vstv %s592
    %v594 = vmul.f32 %v556, %v593
    %v595 = vmul.f32 %v557, %v593
    %v596 = vadd.f32 %v590, %v594
    %v597 = vadd.f32 %v591, %v595
    %s598 = sld [smem:[#allocation10 + $0x29]]
    %v599 = vstv %s598
    %v600 = vmul.f32 %v558, %v599
    %v601 = vmul.f32 %v559, %v599
    %v602 = vadd.f32 %v596, %v600
    %v603 = vadd.f32 %v597, %v601
    %s604 = sld [smem:[#allocation10 + $0x2d]]
    %v605 = vstv %s604
    %v606 = vmul.f32 %v560, %v605
    %v607 = vmul.f32 %v561, %v605
    %v608 = vadd.f32 %v602, %v606
    %v609 = vadd.f32 %v603, %v607
    %s610 = sld [smem:[#allocation10 + $0x22]]
    %v611 = vstv %s610
    %v612 = vmul.f32 %v554, %v611
    %v613 = vmul.f32 %v555, %v611
    %v614 = vadd.f32 %v496, %v612
    %v615 = vadd.f32 %v497, %v613
    %s616 = sld [smem:[#allocation10 + $0x26]]
    %v617 = vstv %s616
    %v618 = vmul.f32 %v556, %v617
    %v619 = vmul.f32 %v557, %v617
    %v620 = vadd.f32 %v614, %v618
    %v621 = vadd.f32 %v615, %v619
    %s622 = sld [smem:[#allocation10 + $0x2a]]
    %v623 = vstv %s622
    %v624 = vmul.f32 %v558, %v623
    %v625 = vmul.f32 %v559, %v623
    %v626 = vadd.f32 %v620, %v624
    %v627 = vadd.f32 %v621, %v625
    %s628 = sld [smem:[#allocation10 + $0x2e]]
    %v629 = vstv %s628
    %v630 = vmul.f32 %v560, %v629
    %v631 = vmul.f32 %v561, %v629
    %v632 = vadd.f32 %v626, %v630
    %v633 = vadd.f32 %v627, %v631
    %s634 = sld [smem:[#allocation10 + $0x23]]
    %v635 = vstv %s634
    %v636 = vmul.f32 %v554, %v635
    %v637 = vmul.f32 %v555, %v635
    %v638 = vadd.f32 %v520, %v636
    %v639 = vadd.f32 %v521, %v637
    %s640 = sld [smem:[#allocation10 + $0x27]]
    %v641 = vstv %s640
    %v642 = vmul.f32 %v556, %v641
    %v643 = vmul.f32 %v557, %v641
    %v644 = vadd.f32 %v638, %v642
    %v645 = vadd.f32 %v639, %v643
    %s646 = sld [smem:[#allocation10 + $0x2b]]
    %v647 = vstv %s646
    %v648 = vmul.f32 %v558, %v647
    %v649 = vmul.f32 %v559, %v647
    %v650 = vadd.f32 %v644, %v648
    %v651 = vadd.f32 %v645, %v649
    %s652 = sld [smem:[#allocation10 + $0x2f]]
    %v653 = vstv %s652
    %v654 = vmul.f32 %v560, %v653
    %v655 = vmul.f32 %v561, %v653
    %v656 = vadd.f32 %v650, %v654
    %v657 = vadd.f32 %v651, %v655
    %658 = vrot.lane.b32.xlu0 %v171, 1
    %v659 = vpop.permute.xlu0 %658
    %660 = vrot.lane.b32.xlu0 %v199, 1
    %v661 = vpop.permute.xlu0 %660
    %662 = vrot.lane.b32.xlu0 %v227, 1
    %v663 = vpop.permute.xlu0 %662
    %664 = vrot.lane.b32.xlu0 %v255, 1
    %v665 = vpop.permute.xlu0 %664
    %666 = vrot.lane.b32.xlu0 %v172, 1
    %v667 = vpop.permute.xlu0 %666
    %668 = vrot.lane.b32.xlu0 %v200, 1
    %v669 = vpop.permute.xlu0 %668
    %670 = vrot.lane.b32.xlu0 %v228, 1
    %v671 = vpop.permute.xlu0 %670
    %672 = vrot.lane.b32.xlu0 %v256, 1
    %v673 = vpop.permute.xlu0 %672
    %vm674 = vcmp.lt.s32.totalorder %v274, 1
    %v675 = vsel %vm674, %v659, %v667
    %v676 = vsel %vm674, %v661, %v669
    %v677 = vsel %vm674, %v663, %v671
    %v678 = vsel %vm674, %v665, %v673
    %v679 = vsel %vm674, %v667, %v659
    %v680 = vsel %vm674, %v669, %v661
    %v681 = vsel %vm674, %v671, %v663
    %v682 = vsel %vm674, %v673, %v665
    %s683 = scalar_lea.vmem [#allocation16], 3
    %v684 = vld [vmem:[%s683] ss:$8 sm:$0x3]
    %v686 = vperm.slane %v684, 0
    %v687 = vperm.slane %v684, 1
    %v690 = vmul.f32 %v679, %v686
    %v691 = vmul.f32 %v675, %v687
    %v692 = vmul.f32 %v680, %v686
    %v693 = vmul.f32 %v676, %v687
    %v694 = vmul.f32 %v681, %v686
    %v695 = vmul.f32 %v677, %v687
    %v696 = vmul.f32 %v682, %v686
    %v697 = vmul.f32 %v678, %v687
    %s698 = sld [smem:[#allocation10 + $0x30]]
    %v699 = vstv %s698
    %v700 = vmul.f32 %v690, %v699
    %v701 = vmul.f32 %v691, %v699
    %v702 = vadd.f32 %v584, %v700
    %v703 = vadd.f32 %v585, %v701
    %s704 = sld [smem:[#allocation10 + $0x34]]
    %v705 = vstv %s704
    %v706 = vmul.f32 %v692, %v705
    %v707 = vmul.f32 %v693, %v705
    %v708 = vadd.f32 %v702, %v706
    %v709 = vadd.f32 %v703, %v707
    %s710 = sld [smem:[#allocation10 + $0x38]]
    %v711 = vstv %s710
    %v712 = vmul.f32 %v694, %v711
    %v713 = vmul.f32 %v695, %v711
    %v714 = vadd.f32 %v708, %v712
    %v715 = vadd.f32 %v709, %v713
    %s716 = sld [smem:[#allocation10 + $0x3c]]
    %v717 = vstv %s716
    %v718 = vmul.f32 %v696, %v717
    %v719 = vmul.f32 %v697, %v717
    %v720 = vadd.f32 %v714, %v718
    %v721 = vadd.f32 %v715, %v719
    %s722 = sld [smem:[#allocation10 + $0x31]]
    %v723 = vstv %s722
    %v724 = vmul.f32 %v690, %v723
    %v725 = vmul.f32 %v691, %v723
    %v726 = vadd.f32 %v608, %v724
    %v727 = vadd.f32 %v609, %v725
    %s728 = sld [smem:[#allocation10 + $0x35]]
    %v729 = vstv %s728
    %v730 = vmul.f32 %v692, %v729
    %v731 = vmul.f32 %v693, %v729
    %v732 = vadd.f32 %v726, %v730
    %v733 = vadd.f32 %v727, %v731
    %s734 = sld [smem:[#allocation10 + $0x39]]
    %v735 = vstv %s734
    %v736 = vmul.f32 %v694, %v735
    %v737 = vmul.f32 %v695, %v735
    %v738 = vadd.f32 %v732, %v736
    %v739 = vadd.f32 %v733, %v737
    %s740 = sld [smem:[#allocation10 + $0x3d]]
    %v741 = vstv %s740
    %v742 = vmul.f32 %v696, %v741
    %v743 = vmul.f32 %v697, %v741
    %v744 = vadd.f32 %v738, %v742
    %v745 = vadd.f32 %v739, %v743
    %s746 = sld [smem:[#allocation10 + $0x32]]
    %v747 = vstv %s746
    %v748 = vmul.f32 %v690, %v747
    %v749 = vmul.f32 %v691, %v747
    %v750 = vadd.f32 %v632, %v748
    %v751 = vadd.f32 %v633, %v749
    %s752 = sld [smem:[#allocation10 + $0x36]]
    %v753 = vstv %s752
    %v754 = vmul.f32 %v692, %v753
    %v755 = vmul.f32 %v693, %v753
    %v756 = vadd.f32 %v750, %v754
    %v757 = vadd.f32 %v751, %v755
    %s758 = sld [smem:[#allocation10 + $0x3a]]
    %v759 = vstv %s758
    %v760 = vmul.f32 %v694, %v759
    %v761 = vmul.f32 %v695, %v759
    %v762 = vadd.f32 %v756, %v760
    %v763 = vadd.f32 %v757, %v761
    %s764 = sld [smem:[#allocation10 + $0x3e]]
    %v765 = vstv %s764
    %v766 = vmul.f32 %v696, %v765
    %v767 = vmul.f32 %v697, %v765
    %v768 = vadd.f32 %v762, %v766
    %v769 = vadd.f32 %v763, %v767
    %s770 = sld [smem:[#allocation10 + $0x33]]
    %v771 = vstv %s770
    %v772 = vmul.f32 %v690, %v771
    %v773 = vmul.f32 %v691, %v771
    %v774 = vadd.f32 %v656, %v772
    %v775 = vadd.f32 %v657, %v773
    %s776 = sld [smem:[#allocation10 + $0x37]]
    %v777 = vstv %s776
    %v778 = vmul.f32 %v692, %v777
    %v779 = vmul.f32 %v693, %v777
    %v780 = vadd.f32 %v774, %v778
    %v781 = vadd.f32 %v775, %v779
    %s782 = sld [smem:[#allocation10 + $0x3b]]
    %v783 = vstv %s782
    %v784 = vmul.f32 %v694, %v783
    %v785 = vmul.f32 %v695, %v783
    %v786 = vadd.f32 %v780, %v784
    %v787 = vadd.f32 %v781, %v785
    %s788 = sld [smem:[#allocation10 + $0x3f]]
    %v789 = vstv %s788
    %v790 = vmul.f32 %v696, %v789
    %v791 = vmul.f32 %v697, %v789
    %v792 = vadd.f32 %v786, %v790
    %v793 = vadd.f32 %v787, %v791
    %s794 = sld [smem:[#allocation10 + $0x40]]
    %v795 = vstv %s794
    %v796 = vmul.f32 %v171, %v795
    %v797 = vmul.f32 %v172, %v795
    %v798 = vadd.f32 %v720, %v796
    %v799 = vadd.f32 %v721, %v797
    %s800 = sld [smem:[#allocation10 + $0x44]]
    %v801 = vstv %s800
    %v802 = vmul.f32 %v199, %v801
    %v803 = vmul.f32 %v200, %v801
    %v804 = vadd.f32 %v798, %v802
    %v805 = vadd.f32 %v799, %v803
    %s806 = sld [smem:[#allocation10 + $0x48]]
    %v807 = vstv %s806
    %v808 = vmul.f32 %v227, %v807
    %v809 = vmul.f32 %v228, %v807
    %v810 = vadd.f32 %v804, %v808
    %v811 = vadd.f32 %v805, %v809
    %s812 = sld [smem:[#allocation10 + $0x4c]]
    %v813 = vstv %s812
    %v814 = vmul.f32 %v255, %v813
    %v815 = vmul.f32 %v256, %v813
    %v816 = vadd.f32 %v810, %v814
    %v817 = vadd.f32 %v811, %v815
    %s818 = sld [smem:[#allocation10 + $0x41]]
    %v819 = vstv %s818
    %v820 = vmul.f32 %v171, %v819
    %v821 = vmul.f32 %v172, %v819
    %v822 = vadd.f32 %v744, %v820
    %v823 = vadd.f32 %v745, %v821
    %s824 = sld [smem:[#allocation10 + $0x45]]
    %v825 = vstv %s824
    %v826 = vmul.f32 %v199, %v825
    %v827 = vmul.f32 %v200, %v825
    %v828 = vadd.f32 %v822, %v826
    %v829 = vadd.f32 %v823, %v827
    %s830 = sld [smem:[#allocation10 + $0x49]]
    %v831 = vstv %s830
    %v832 = vmul.f32 %v227, %v831
    %v833 = vmul.f32 %v228, %v831
    %v834 = vadd.f32 %v828, %v832
    %v835 = vadd.f32 %v829, %v833
    %s836 = sld [smem:[#allocation10 + $0x4d]]
    %v837 = vstv %s836
    %v838 = vmul.f32 %v255, %v837
    %v839 = vmul.f32 %v256, %v837
    %v840 = vadd.f32 %v834, %v838
    %v841 = vadd.f32 %v835, %v839
    %s842 = sld [smem:[#allocation10 + $0x42]]
    %v843 = vstv %s842
    %v844 = vmul.f32 %v171, %v843
    %v845 = vmul.f32 %v172, %v843
    %v846 = vadd.f32 %v768, %v844
    %v847 = vadd.f32 %v769, %v845
    %s848 = sld [smem:[#allocation10 + $0x46]]
    %v849 = vstv %s848
    %v850 = vmul.f32 %v199, %v849
    %v851 = vmul.f32 %v200, %v849
    %v852 = vadd.f32 %v846, %v850
    %v853 = vadd.f32 %v847, %v851
    %s854 = sld [smem:[#allocation10 + $0x4a]]
    %v855 = vstv %s854
    %v856 = vmul.f32 %v227, %v855
    %v857 = vmul.f32 %v228, %v855
    %v858 = vadd.f32 %v852, %v856
    %v859 = vadd.f32 %v853, %v857
    %s860 = sld [smem:[#allocation10 + $0x4e]]
    %v861 = vstv %s860
    %v862 = vmul.f32 %v255, %v861
    %v863 = vmul.f32 %v256, %v861
    %v864 = vadd.f32 %v858, %v862
    %v865 = vadd.f32 %v859, %v863
    %s866 = sld [smem:[#allocation10 + $0x43]]
    %v867 = vstv %s866
    %v868 = vmul.f32 %v171, %v867
    %v869 = vmul.f32 %v172, %v867
    %v870 = vadd.f32 %v792, %v868
    %v871 = vadd.f32 %v793, %v869
    %s872 = sld [smem:[#allocation10 + $0x47]]
    %v873 = vstv %s872
    %v874 = vmul.f32 %v199, %v873
    %v875 = vmul.f32 %v200, %v873
    %v876 = vadd.f32 %v870, %v874
    %v877 = vadd.f32 %v871, %v875
    %s878 = sld [smem:[#allocation10 + $0x4b]]
    %v879 = vstv %s878
    %v880 = vmul.f32 %v227, %v879
    %v881 = vmul.f32 %v228, %v879
    %v882 = vadd.f32 %v876, %v880
    %v883 = vadd.f32 %v877, %v881
    %s884 = sld [smem:[#allocation10 + $0x4f]]
    %v885 = vstv %s884
    %v886 = vmul.f32 %v255, %v885
    %v887 = vmul.f32 %v256, %v885
    %v888 = vadd.f32 %v882, %v886
    %v889 = vadd.f32 %v883, %v887
    %890 = vrot.lane.b32.xlu0 %v171, 127
    %v891 = vpop.permute.xlu0 %890
    %892 = vrot.lane.b32.xlu0 %v199, 127
    %v893 = vpop.permute.xlu0 %892
    %894 = vrot.lane.b32.xlu0 %v227, 127
    %v895 = vpop.permute.xlu0 %894
    %896 = vrot.lane.b32.xlu0 %v255, 127
    %v897 = vpop.permute.xlu0 %896
    %898 = vrot.lane.b32.xlu0 %v172, 127
    %v899 = vpop.permute.xlu0 %898
    %900 = vrot.lane.b32.xlu0 %v200, 127
    %v901 = vpop.permute.xlu0 %900
    %902 = vrot.lane.b32.xlu0 %v228, 127
    %v903 = vpop.permute.xlu0 %902
    %904 = vrot.lane.b32.xlu0 %v256, 127
    %v905 = vpop.permute.xlu0 %904
    %vm906 = vcmp.lt.s32.totalorder %v274, 127
    %v907 = vsel %vm906, %v891, %v899
    %v908 = vsel %vm906, %v893, %v901
    %v909 = vsel %vm906, %v895, %v903
    %v910 = vsel %vm906, %v897, %v905
    %v911 = vsel %vm906, %v899, %v891
    %v912 = vsel %vm906, %v901, %v893
    %v913 = vsel %vm906, %v903, %v895
    %v914 = vsel %vm906, %v905, %v897
    %s915 = scalar_lea.vmem [#allocation16], 5
    %v916 = vld [vmem:[%s915] ss:$8 sm:$0x3]
    %v918 = vperm.slane %v916, 0
    %v919 = vperm.slane %v916, 1
    %v922 = vmul.f32 %v907, %v918
    %v923 = vmul.f32 %v911, %v919
    %v924 = vmul.f32 %v908, %v918
    %v925 = vmul.f32 %v912, %v919
    %v926 = vmul.f32 %v909, %v918
    %v927 = vmul.f32 %v913, %v919
    %v928 = vmul.f32 %v910, %v918
    %v929 = vmul.f32 %v914, %v919
    %s930 = sld [smem:[#allocation10 + $0x50]]
    %v931 = vstv %s930
    %v932 = vmul.f32 %v922, %v931
    %v933 = vmul.f32 %v923, %v931
    %v934 = vadd.f32 %v816, %v932
    %v935 = vadd.f32 %v817, %v933
    %s936 = sld [smem:[#allocation10 + $0x54]]
    %v937 = vstv %s936
    %v938 = vmul.f32 %v924, %v937
    %v939 = vmul.f32 %v925, %v937
    %v940 = vadd.f32 %v934, %v938
    %v941 = vadd.f32 %v935, %v939
    %s942 = sld [smem:[#allocation10 + $0x58]]
    %v943 = vstv %s942
    %v944 = vmul.f32 %v926, %v943
    %v945 = vmul.f32 %v927, %v943
    %v946 = vadd.f32 %v940, %v944
    %v947 = vadd.f32 %v941, %v945
    %s948 = sld [smem:[#allocation10 + $0x5c]]
    %v949 = vstv %s948
    %v950 = vmul.f32 %v928, %v949
    %v951 = vmul.f32 %v929, %v949
    %v952 = vadd.f32 %v946, %v950
    %v953 = vadd.f32 %v947, %v951
    %s954 = sld [smem:[#allocation10 + $0x51]]
    %v955 = vstv %s954
    %v956 = vmul.f32 %v922, %v955
    %v957 = vmul.f32 %v923, %v955
    %v958 = vadd.f32 %v840, %v956
    %v959 = vadd.f32 %v841, %v957
    %s960 = sld [smem:[#allocation10 + $0x55]]
    %v961 = vstv %s960
    %v962 = vmul.f32 %v924, %v961
    %v963 = vmul.f32 %v925, %v961
    %v964 = vadd.f32 %v958, %v962
    %v965 = vadd.f32 %v959, %v963
    %s966 = sld [smem:[#allocation10 + $0x59]]
    %v967 = vstv %s966
    %v968 = vmul.f32 %v926, %v967
    %v969 = vmul.f32 %v927, %v967
    %v970 = vadd.f32 %v964, %v968
    %v971 = vadd.f32 %v965, %v969
    %s972 = sld [smem:[#allocation10 + $0x5d]]
    %v973 = vstv %s972
    %v974 = vmul.f32 %v928, %v973
    %v975 = vmul.f32 %v929, %v973
    %v976 = vadd.f32 %v970, %v974
    %v977 = vadd.f32 %v971, %v975
    %s978 = sld [smem:[#allocation10 + $0x52]]
    %v979 = vstv %s978
    %v980 = vmul.f32 %v922, %v979
    %v981 = vmul.f32 %v923, %v979
    %v982 = vadd.f32 %v864, %v980
    %v983 = vadd.f32 %v865, %v981
    %s984 = sld [smem:[#allocation10 + $0x56]]
    %v985 = vstv %s984
    %v986 = vmul.f32 %v924, %v985
    %v987 = vmul.f32 %v925, %v985
    %v988 = vadd.f32 %v982, %v986
    %v989 = vadd.f32 %v983, %v987
    %s990 = sld [smem:[#allocation10 + $0x5a]]
    %v991 = vstv %s990
    %v992 = vmul.f32 %v926, %v991
    %v993 = vmul.f32 %v927, %v991
    %v994 = vadd.f32 %v988, %v992
    %v995 = vadd.f32 %v989, %v993
    %s996 = sld [smem:[#allocation10 + $0x5e]]
    %v997 = vstv %s996
    %v998 = vmul.f32 %v928, %v997
    %v999 = vmul.f32 %v929, %v997
    %v1000 = vadd.f32 %v994, %v998
    %v1001 = vadd.f32 %v995, %v999
    %s1002 = sld [smem:[#allocation10 + $0x53]]
    %v1003 = vstv %s1002
    %v1004 = vmul.f32 %v922, %v1003
    %v1005 = vmul.f32 %v923, %v1003
    %v1006 = vadd.f32 %v888, %v1004
    %v1007 = vadd.f32 %v889, %v1005
    %s1008 = sld [smem:[#allocation10 + $0x57]]
    %v1009 = vstv %s1008
    %v1010 = vmul.f32 %v924, %v1009
    %v1011 = vmul.f32 %v925, %v1009
    %v1012 = vadd.f32 %v1006, %v1010
    %v1013 = vadd.f32 %v1007, %v1011
    %s1014 = sld [smem:[#allocation10 + $0x5b]]
    %v1015 = vstv %s1014
    %v1016 = vmul.f32 %v926, %v1015
    %v1017 = vmul.f32 %v927, %v1015
    %v1018 = vadd.f32 %v1012, %v1016
    %v1019 = vadd.f32 %v1013, %v1017
    %s1020 = sld [smem:[#allocation10 + $0x5f]]
    %v1021 = vstv %s1020
    %v1022 = vmul.f32 %v928, %v1021
    %v1023 = vmul.f32 %v929, %v1021
    %v1024 = vadd.f32 %v1018, %v1022
    %v1025 = vadd.f32 %v1019, %v1023
    %1026 = vrot.lane.b32.xlu0 %v171, 113
    %v1027 = vpop.permute.xlu0 %1026
    %1028 = vrot.lane.b32.xlu0 %v199, 113
    %v1029 = vpop.permute.xlu0 %1028
    %1030 = vrot.lane.b32.xlu0 %v227, 113
    %v1031 = vpop.permute.xlu0 %1030
    %1032 = vrot.lane.b32.xlu0 %v255, 113
    %v1033 = vpop.permute.xlu0 %1032
    %1034 = vrot.lane.b32.xlu0 %v172, 113
    %v1035 = vpop.permute.xlu0 %1034
    %1036 = vrot.lane.b32.xlu0 %v200, 113
    %v1037 = vpop.permute.xlu0 %1036
    %1038 = vrot.lane.b32.xlu0 %v228, 113
    %v1039 = vpop.permute.xlu0 %1038
    %1040 = vrot.lane.b32.xlu0 %v256, 113
    %v1041 = vpop.permute.xlu0 %1040
    %vm1042 = vcmp.lt.s32.totalorder %v274, 113
    %v1043 = vsel %vm1042, %v1027, %v1035
    %v1044 = vsel %vm1042, %v1029, %v1037
    %v1045 = vsel %vm1042, %v1031, %v1039
    %v1046 = vsel %vm1042, %v1033, %v1041
    %v1047 = vsel %vm1042, %v1035, %v1027
    %v1048 = vsel %vm1042, %v1037, %v1029
    %v1049 = vsel %vm1042, %v1039, %v1031
    %v1050 = vsel %vm1042, %v1041, %v1033
    %s1051 = scalar_lea.vmem [#allocation16], 6
    %v1052 = vld [vmem:[%s1051] ss:$8 sm:$0x3]
    %v1054 = vperm.slane %v1052, 0
    %v1055 = vperm.slane %v1052, 1
    %v1058 = vmul.f32 %v1043, %v1054
    %v1059 = vmul.f32 %v1047, %v1055
    %v1060 = vmul.f32 %v1044, %v1054
    %v1061 = vmul.f32 %v1048, %v1055
    %v1062 = vmul.f32 %v1045, %v1054
    %v1063 = vmul.f32 %v1049, %v1055
    %v1064 = vmul.f32 %v1046, %v1054
    %v1065 = vmul.f32 %v1050, %v1055
    %s1066 = sld [smem:[#allocation10 + $0x60]]
    %v1067 = vstv %s1066
    %v1068 = vmul.f32 %v1058, %v1067
    %v1069 = vmul.f32 %v1059, %v1067
    %v1070 = vadd.f32 %v952, %v1068
    %v1071 = vadd.f32 %v953, %v1069
    %s1072 = sld [smem:[#allocation10 + $0x64]]
    %v1073 = vstv %s1072
    %v1074 = vmul.f32 %v1060, %v1073
    %v1075 = vmul.f32 %v1061, %v1073
    %v1076 = vadd.f32 %v1070, %v1074
    %v1077 = vadd.f32 %v1071, %v1075
    %s1078 = sld [smem:[#allocation10 + $0x68]]
    %v1079 = vstv %s1078
    %v1080 = vmul.f32 %v1062, %v1079
    %v1081 = vmul.f32 %v1063, %v1079
    %v1082 = vadd.f32 %v1076, %v1080
    %v1083 = vadd.f32 %v1077, %v1081
    %s1084 = sld [smem:[#allocation10 + $0x6c]]
    %v1085 = vstv %s1084
    %v1086 = vmul.f32 %v1064, %v1085
    %v1087 = vmul.f32 %v1065, %v1085
    %v1088 = vadd.f32 %v1082, %v1086
    %v1089 = vadd.f32 %v1083, %v1087
    %s1090 = sld [smem:[#allocation10 + $0x61]]
    %v1091 = vstv %s1090
    %v1092 = vmul.f32 %v1058, %v1091
    %v1093 = vmul.f32 %v1059, %v1091
    %v1094 = vadd.f32 %v976, %v1092
    %v1095 = vadd.f32 %v977, %v1093
    %s1096 = sld [smem:[#allocation10 + $0x65]]
    %v1097 = vstv %s1096
    %v1098 = vmul.f32 %v1060, %v1097
    %v1099 = vmul.f32 %v1061, %v1097
    %v1100 = vadd.f32 %v1094, %v1098
    %v1101 = vadd.f32 %v1095, %v1099
    %s1102 = sld [smem:[#allocation10 + $0x69]]
    %v1103 = vstv %s1102
    %v1104 = vmul.f32 %v1062, %v1103
    %v1105 = vmul.f32 %v1063, %v1103
    %v1106 = vadd.f32 %v1100, %v1104
    %v1107 = vadd.f32 %v1101, %v1105
    %s1108 = sld [smem:[#allocation10 + $0x6d]]
    %v1109 = vstv %s1108
    %v1110 = vmul.f32 %v1064, %v1109
    %v1111 = vmul.f32 %v1065, %v1109
    %v1112 = vadd.f32 %v1106, %v1110
    %v1113 = vadd.f32 %v1107, %v1111
    %s1114 = sld [smem:[#allocation10 + $0x62]]
    %v1115 = vstv %s1114
    %v1116 = vmul.f32 %v1058, %v1115
    %v1117 = vmul.f32 %v1059, %v1115
    %v1118 = vadd.f32 %v1000, %v1116
    %v1119 = vadd.f32 %v1001, %v1117
    %s1120 = sld [smem:[#allocation10 + $0x66]]
    %v1121 = vstv %s1120
    %v1122 = vmul.f32 %v1060, %v1121
    %v1123 = vmul.f32 %v1061, %v1121
    %v1124 = vadd.f32 %v1118, %v1122
    %v1125 = vadd.f32 %v1119, %v1123
    %s1126 = sld [smem:[#allocation10 + $0x6a]]
    %v1127 = vstv %s1126
    %v1128 = vmul.f32 %v1062, %v1127
    %v1129 = vmul.f32 %v1063, %v1127
    %v1130 = vadd.f32 %v1124, %v1128
    %v1131 = vadd.f32 %v1125, %v1129
    %s1132 = sld [smem:[#allocation10 + $0x6e]]
    %v1133 = vstv %s1132
    %v1134 = vmul.f32 %v1064, %v1133
    %v1135 = vmul.f32 %v1065, %v1133
    %v1136 = vadd.f32 %v1130, %v1134
    %v1137 = vadd.f32 %v1131, %v1135
    %s1138 = sld [smem:[#allocation10 + $0x63]]
    %v1139 = vstv %s1138
    %v1140 = vmul.f32 %v1058, %v1139
    %v1141 = vmul.f32 %v1059, %v1139
    %v1142 = vadd.f32 %v1024, %v1140
    %v1143 = vadd.f32 %v1025, %v1141
    %s1144 = sld [smem:[#allocation10 + $0x67]]
    %v1145 = vstv %s1144
    %v1146 = vmul.f32 %v1060, %v1145
    %v1147 = vmul.f32 %v1061, %v1145
    %v1148 = vadd.f32 %v1142, %v1146
    %v1149 = vadd.f32 %v1143, %v1147
    %s1150 = sld [smem:[#allocation10 + $0x6b]]
    %v1151 = vstv %s1150
    %v1152 = vmul.f32 %v1062, %v1151
    %v1153 = vmul.f32 %v1063, %v1151
    %v1154 = vadd.f32 %v1148, %v1152
    %v1155 = vadd.f32 %v1149, %v1153
    %s1156 = sld [smem:[#allocation10 + $0x6f]]
    %v1157 = vstv %s1156
    %v1158 = vmul.f32 %v1064, %v1157
    %v1159 = vmul.f32 %v1065, %v1157
    %v1160 = vadd.f32 %v1154, %v1158
    %v1161 = vadd.f32 %v1155, %v1159
    %1162 = vrot.lane.b32.xlu0 %v171, 112
    %v1163 = vpop.permute.xlu0 %1162
    %1164 = vrot.lane.b32.xlu0 %v199, 112
    %v1165 = vpop.permute.xlu0 %1164
    %1166 = vrot.lane.b32.xlu0 %v227, 112
    %v1167 = vpop.permute.xlu0 %1166
    %1168 = vrot.lane.b32.xlu0 %v255, 112
    %v1169 = vpop.permute.xlu0 %1168
    %1170 = vrot.lane.b32.xlu0 %v172, 112
    %v1171 = vpop.permute.xlu0 %1170
    %1172 = vrot.lane.b32.xlu0 %v200, 112
    %v1173 = vpop.permute.xlu0 %1172
    %1174 = vrot.lane.b32.xlu0 %v228, 112
    %v1175 = vpop.permute.xlu0 %1174
    %1176 = vrot.lane.b32.xlu0 %v256, 112
    %v1177 = vpop.permute.xlu0 %1176
    %vm1178 = vcmp.lt.s32.totalorder %v274, 112
    %v1179 = vsel %vm1178, %v1163, %v1171
    %v1180 = vsel %vm1178, %v1165, %v1173
    %v1181 = vsel %vm1178, %v1167, %v1175
    %v1182 = vsel %vm1178, %v1169, %v1177
    %v1183 = vsel %vm1178, %v1171, %v1163
    %v1184 = vsel %vm1178, %v1173, %v1165
    %v1185 = vsel %vm1178, %v1175, %v1167
    %v1186 = vsel %vm1178, %v1177, %v1169
    %s1187 = scalar_lea.vmem [#allocation16], 7
    %v1188 = vld [vmem:[%s1187] ss:$8 sm:$0x3]
    %v1190 = vperm.slane %v1188, 0
    %v1191 = vperm.slane %v1188, 1
    %v1194 = vmul.f32 %v1179, %v1190
    %v1195 = vmul.f32 %v1183, %v1191
    %v1196 = vmul.f32 %v1180, %v1190
    %v1197 = vmul.f32 %v1184, %v1191
    %v1198 = vmul.f32 %v1181, %v1190
    %v1199 = vmul.f32 %v1185, %v1191
    %v1200 = vmul.f32 %v1182, %v1190
    %v1201 = vmul.f32 %v1186, %v1191
    %s1202 = sld [smem:[#allocation10 + $0x70]]
    %v1203 = vstv %s1202
    %v1204 = vmul.f32 %v1194, %v1203
    %v1205 = vmul.f32 %v1195, %v1203
    %v1206 = vadd.f32 %v1088, %v1204
    %v1207 = vadd.f32 %v1089, %v1205
    %s1208 = sld [smem:[#allocation10 + $0x74]]
    %v1209 = vstv %s1208
    %v1210 = vmul.f32 %v1196, %v1209
    %v1211 = vmul.f32 %v1197, %v1209
    %v1212 = vadd.f32 %v1206, %v1210
    %v1213 = vadd.f32 %v1207, %v1211
    %s1214 = sld [smem:[#allocation10 + $0x78]]
    %v1215 = vstv %s1214
    %v1216 = vmul.f32 %v1198, %v1215
    %v1217 = vmul.f32 %v1199, %v1215
    %v1218 = vadd.f32 %v1212, %v1216
    %v1219 = vadd.f32 %v1213, %v1217
    %s1220 = sld [smem:[#allocation10 + $0x7c]]
    %v1221 = vstv %s1220
    %v1222 = vmul.f32 %v1200, %v1221
    %v1223 = vmul.f32 %v1201, %v1221
    %v1224 = vadd.f32 %v1218, %v1222
    %v1225 = vadd.f32 %v1219, %v1223
    %s1226 = sld [smem:[#allocation10 + $0x71]]
    %v1227 = vstv %s1226
    %v1228 = vmul.f32 %v1194, %v1227
    %v1229 = vmul.f32 %v1195, %v1227
    %v1230 = vadd.f32 %v1112, %v1228
    %v1231 = vadd.f32 %v1113, %v1229
    %s1232 = sld [smem:[#allocation10 + $0x75]]
    %v1233 = vstv %s1232
    %v1234 = vmul.f32 %v1196, %v1233
    %v1235 = vmul.f32 %v1197, %v1233
    %v1236 = vadd.f32 %v1230, %v1234
    %v1237 = vadd.f32 %v1231, %v1235
    %s1238 = sld [smem:[#allocation10 + $0x79]]
    %v1239 = vstv %s1238
    %v1240 = vmul.f32 %v1198, %v1239
    %v1241 = vmul.f32 %v1199, %v1239
    %v1242 = vadd.f32 %v1236, %v1240
    %v1243 = vadd.f32 %v1237, %v1241
    %s1244 = sld [smem:[#allocation10 + $0x7d]]
    %v1245 = vstv %s1244
    %v1246 = vmul.f32 %v1200, %v1245
    %v1247 = vmul.f32 %v1201, %v1245
    %v1248 = vadd.f32 %v1242, %v1246
    %v1249 = vadd.f32 %v1243, %v1247
    %s1250 = sld [smem:[#allocation10 + $0x72]]
    %v1251 = vstv %s1250
    %v1252 = vmul.f32 %v1194, %v1251
    %v1253 = vmul.f32 %v1195, %v1251
    %v1254 = vadd.f32 %v1136, %v1252
    %v1255 = vadd.f32 %v1137, %v1253
    %s1256 = sld [smem:[#allocation10 + $0x76]]
    %v1257 = vstv %s1256
    %v1258 = vmul.f32 %v1196, %v1257
    %v1259 = vmul.f32 %v1197, %v1257
    %v1260 = vadd.f32 %v1254, %v1258
    %v1261 = vadd.f32 %v1255, %v1259
    %s1262 = sld [smem:[#allocation10 + $0x7a]]
    %v1263 = vstv %s1262
    %v1264 = vmul.f32 %v1198, %v1263
    %v1265 = vmul.f32 %v1199, %v1263
    %v1266 = vadd.f32 %v1260, %v1264
    %v1267 = vadd.f32 %v1261, %v1265
    %s1268 = sld [smem:[#allocation10 + $0x7e]]
    %v1269 = vstv %s1268
    %v1270 = vmul.f32 %v1200, %v1269
    %v1271 = vmul.f32 %v1201, %v1269
    %v1272 = vadd.f32 %v1266, %v1270
    %v1273 = vadd.f32 %v1267, %v1271
    %s1274 = sld [smem:[#allocation10 + $0x73]]
    %v1275 = vstv %s1274
    %v1276 = vmul.f32 %v1194, %v1275
    %v1277 = vmul.f32 %v1195, %v1275
    %v1278 = vadd.f32 %v1160, %v1276
    %v1279 = vadd.f32 %v1161, %v1277
    %s1280 = sld [smem:[#allocation10 + $0x77]]
    %v1281 = vstv %s1280
    %v1282 = vmul.f32 %v1196, %v1281
    %v1283 = vmul.f32 %v1197, %v1281
    %v1284 = vadd.f32 %v1278, %v1282
    %v1285 = vadd.f32 %v1279, %v1283
    %s1286 = sld [smem:[#allocation10 + $0x7b]]
    %v1287 = vstv %s1286
    %v1288 = vmul.f32 %v1198, %v1287
    %v1289 = vmul.f32 %v1199, %v1287
    %v1290 = vadd.f32 %v1284, %v1288
    %v1291 = vadd.f32 %v1285, %v1289
    %s1292 = sld [smem:[#allocation10 + $0x7f]]
    %v1293 = vstv %s1292
    %v1294 = vmul.f32 %v1200, %v1293
    %v1295 = vmul.f32 %v1201, %v1293
    %v1296 = vadd.f32 %v1290, %v1294
    %v1297 = vadd.f32 %v1291, %v1295
    %1298 = vrot.lane.b32.xlu0 %v171, 111
    %v1299 = vpop.permute.xlu0 %1298
    %1300 = vrot.lane.b32.xlu0 %v199, 111
    %v1301 = vpop.permute.xlu0 %1300
    %1302 = vrot.lane.b32.xlu0 %v227, 111
    %v1303 = vpop.permute.xlu0 %1302
    %1304 = vrot.lane.b32.xlu0 %v255, 111
    %v1305 = vpop.permute.xlu0 %1304
    %1306 = vrot.lane.b32.xlu0 %v172, 111
    %v1307 = vpop.permute.xlu0 %1306
    %1308 = vrot.lane.b32.xlu0 %v200, 111
    %v1309 = vpop.permute.xlu0 %1308
    %1310 = vrot.lane.b32.xlu0 %v228, 111
    %v1311 = vpop.permute.xlu0 %1310
    %1312 = vrot.lane.b32.xlu0 %v256, 111
    %v1313 = vpop.permute.xlu0 %1312
    %vm1314 = vcmp.lt.s32.totalorder %v274, 111
    %v1315 = vsel %vm1314, %v1299, %v1307
    %v1316 = vsel %vm1314, %v1301, %v1309
    %v1317 = vsel %vm1314, %v1303, %v1311
    %v1318 = vsel %vm1314, %v1305, %v1313
    %v1319 = vsel %vm1314, %v1307, %v1299
    %v1320 = vsel %vm1314, %v1309, %v1301
    %v1321 = vsel %vm1314, %v1311, %v1303
    %v1322 = vsel %vm1314, %v1313, %v1305
    %s1323 = scalar_lea.vmem [#allocation16], 16
    %v1324 = vld [vmem:[%s1323] ss:$8 sm:$0x3]
    %v1326 = vperm.slane %v1324, 0
    %v1327 = vperm.slane %v1324, 1
    %v1330 = vmul.f32 %v1315, %v1326
    %v1331 = vmul.f32 %v1319, %v1327
    %v1332 = vmul.f32 %v1316, %v1326
    %v1333 = vmul.f32 %v1320, %v1327
    %v1334 = vmul.f32 %v1317, %v1326
    %v1335 = vmul.f32 %v1321, %v1327
    %v1336 = vmul.f32 %v1318, %v1326
    %v1337 = vmul.f32 %v1322, %v1327
    %s1338 = sld [smem:[#allocation10 + $0x80]]
    %v1339 = vstv %s1338
    %v1340 = vmul.f32 %v1330, %v1339
    %v1341 = vmul.f32 %v1331, %v1339
    %v1342 = vadd.f32 %v1224, %v1340
    %v1343 = vadd.f32 %v1225, %v1341
    %s1344 = sld [smem:[#allocation10 + $0x84]]
    %v1345 = vstv %s1344
    %v1346 = vmul.f32 %v1332, %v1345
    %v1347 = vmul.f32 %v1333, %v1345
    %v1348 = vadd.f32 %v1342, %v1346
    %v1349 = vadd.f32 %v1343, %v1347
    %s1350 = sld [smem:[#allocation10 + $0x88]]
    %v1351 = vstv %s1350
    %v1352 = vmul.f32 %v1334, %v1351
    %v1353 = vmul.f32 %v1335, %v1351
    %v1354 = vadd.f32 %v1348, %v1352
    %v1355 = vadd.f32 %v1349, %v1353
    %s1356 = sld [smem:[#allocation10 + $0x8c]]
    %v1357 = vstv %s1356
    %v1358 = vmul.f32 %v1336, %v1357
    %v1359 = vmul.f32 %v1337, %v1357
    %v1360 = vadd.f32 %v1354, %v1358
    %v1361 = vadd.f32 %v1355, %v1359
    %s1362 = sld [smem:[#allocation10 + $0x81]]
    %v1363 = vstv %s1362
    %v1364 = vmul.f32 %v1330, %v1363
    %v1365 = vmul.f32 %v1331, %v1363
    %v1366 = vadd.f32 %v1248, %v1364
    %v1367 = vadd.f32 %v1249, %v1365
    %s1368 = sld [smem:[#allocation10 + $0x85]]
    %v1369 = vstv %s1368
    %v1370 = vmul.f32 %v1332, %v1369
    %v1371 = vmul.f32 %v1333, %v1369
    %v1372 = vadd.f32 %v1366, %v1370
    %v1373 = vadd.f32 %v1367, %v1371
    %s1374 = sld [smem:[#allocation10 + $0x89]]
    %v1375 = vstv %s1374
    %v1376 = vmul.f32 %v1334, %v1375
    %v1377 = vmul.f32 %v1335, %v1375
    %v1378 = vadd.f32 %v1372, %v1376
    %v1379 = vadd.f32 %v1373, %v1377
    %s1380 = sld [smem:[#allocation10 + $0x8d]]
    %v1381 = vstv %s1380
    %v1382 = vmul.f32 %v1336, %v1381
    %v1383 = vmul.f32 %v1337, %v1381
    %v1384 = vadd.f32 %v1378, %v1382
    %v1385 = vadd.f32 %v1379, %v1383
    %s1386 = sld [smem:[#allocation10 + $0x82]]
    %v1387 = vstv %s1386
    %v1388 = vmul.f32 %v1330, %v1387
    %v1389 = vmul.f32 %v1331, %v1387
    %v1390 = vadd.f32 %v1272, %v1388
    %v1391 = vadd.f32 %v1273, %v1389
    %s1392 = sld [smem:[#allocation10 + $0x86]]
    %v1393 = vstv %s1392
    %v1394 = vmul.f32 %v1332, %v1393
    %v1395 = vmul.f32 %v1333, %v1393
    %v1396 = vadd.f32 %v1390, %v1394
    %v1397 = vadd.f32 %v1391, %v1395
    %s1398 = sld [smem:[#allocation10 + $0x8a]]
    %v1399 = vstv %s1398
    %v1400 = vmul.f32 %v1334, %v1399
    %v1401 = vmul.f32 %v1335, %v1399
    %v1402 = vadd.f32 %v1396, %v1400
    %v1403 = vadd.f32 %v1397, %v1401
    %s1404 = sld [smem:[#allocation10 + $0x8e]]
    %v1405 = vstv %s1404
    %v1406 = vmul.f32 %v1336, %v1405
    %v1407 = vmul.f32 %v1337, %v1405
    %v1408 = vadd.f32 %v1402, %v1406
    %v1409 = vadd.f32 %v1403, %v1407
    %s1410 = sld [smem:[#allocation10 + $0x83]]
    %v1411 = vstv %s1410
    %v1412 = vmul.f32 %v1330, %v1411
    %v1413 = vmul.f32 %v1331, %v1411
    %v1414 = vadd.f32 %v1296, %v1412
    %v1415 = vadd.f32 %v1297, %v1413
    %s1416 = sld [smem:[#allocation10 + $0x87]]
    %v1417 = vstv %s1416
    %v1418 = vmul.f32 %v1332, %v1417
    %v1419 = vmul.f32 %v1333, %v1417
    %v1420 = vadd.f32 %v1414, %v1418
    %v1421 = vadd.f32 %v1415, %v1419
    %s1422 = sld [smem:[#allocation10 + $0x8b]]
    %v1423 = vstv %s1422
    %v1424 = vmul.f32 %v1334, %v1423
    %v1425 = vmul.f32 %v1335, %v1423
    %v1426 = vadd.f32 %v1420, %v1424
    %v1427 = vadd.f32 %v1421, %v1425
    %s1428 = sld [smem:[#allocation10 + $0x8f]]
    %v1429 = vstv %s1428
    %v1430 = vmul.f32 %v1336, %v1429
    %v1431 = vmul.f32 %v1337, %v1429
    %v1432 = vadd.f32 %v1426, %v1430
    %v1433 = vadd.f32 %v1427, %v1431
    %s1434 = sld [smem:[#allocation11]]
    %v1435 = vstv %s1434
    %v1436 = vadd.f32 %v1360, %v1435
    %v1437 = vadd.f32 %v1361, %v1435
    %v1438 = vmax.f32 %v1436, 0.0
    %v1439 = vmax.f32 %v1437, 0.0
    %s1440 = sld [smem:[#allocation11 + $0x1]]
    %v1441 = vstv %s1440
    %v1442 = vadd.f32 %v1384, %v1441
    %v1443 = vadd.f32 %v1385, %v1441
    %v1444 = vmax.f32 %v1442, 0.0
    %v1445 = vmax.f32 %v1443, 0.0
    %s1446 = sld [smem:[#allocation11 + $0x2]]
    %v1447 = vstv %s1446
    %v1448 = vadd.f32 %v1408, %v1447
    %v1449 = vadd.f32 %v1409, %v1447
    %v1450 = vmax.f32 %v1448, 0.0
    %v1451 = vmax.f32 %v1449, 0.0
    %s1452 = sld [smem:[#allocation11 + $0x3]]
    %v1453 = vstv %s1452
    %v1454 = vadd.f32 %v1432, %v1453
    %v1455 = vadd.f32 %v1433, %v1453
    %v1456 = vmax.f32 %v1454, 0.0
    %v1457 = vmax.f32 %v1455, 0.0
    %s1458 = sld [smem:[#allocation13]]
    %v1459 = vstv %s1458
    %v1460 = vmul.f32 %v1438, %v1459
    %v1461 = vmul.f32 %v1439, %v1459
    %s1462 = sld [smem:[#allocation13 + $0x4]]
    %v1463 = vstv %s1462
    %v1464 = vmul.f32 %v1444, %v1463
    %v1465 = vmul.f32 %v1445, %v1463
    %v1466 = vadd.f32 %v1460, %v1464
    %v1467 = vadd.f32 %v1461, %v1465
    %s1468 = sld [smem:[#allocation13 + $0x8]]
    %v1469 = vstv %s1468
    %v1470 = vmul.f32 %v1450, %v1469
    %v1471 = vmul.f32 %v1451, %v1469
    %v1472 = vadd.f32 %v1466, %v1470
    %v1473 = vadd.f32 %v1467, %v1471
    %s1474 = sld [smem:[#allocation13 + $0xc]]
    %v1475 = vstv %s1474
    %v1476 = vmul.f32 %v1456, %v1475
    %v1477 = vmul.f32 %v1457, %v1475
    %v1478 = vadd.f32 %v1472, %v1476
    %v1479 = vadd.f32 %v1473, %v1477
    %s1480 = sld [smem:[#allocation14]]
    %v1481 = vstv %s1480
    %v1482 = vadd.f32 %v1478, %v1481
    %v1483 = vadd.f32 %v1479, %v1481
    %v1484 = vadd.f32 %v1482, %v134
    %v1485 = vadd.f32 %v1483, %v135
    %v1486 = vmax.f32 %v1484, 0.0
    %v1487 = vmax.f32 %v1485, 0.0
    %1488 = vst [vmem:[#allocation18] sm:$0xff] %v1486
    %1489 = vst [vmem:[#allocation18 + $0x8] sm:$0xff] %v1487
    %s1490 = sld [smem:[#allocation13 + $0x1]]
    %v1491 = vstv %s1490
    %v1492 = vmul.f32 %v1438, %v1491
    %v1493 = vmul.f32 %v1439, %v1491
    %s1494 = sld [smem:[#allocation13 + $0x5]]
    %v1495 = vstv %s1494
    %v1496 = vmul.f32 %v1444, %v1495
    %v1497 = vmul.f32 %v1445, %v1495
    %v1498 = vadd.f32 %v1492, %v1496
    %v1499 = vadd.f32 %v1493, %v1497
    %s1500 = sld [smem:[#allocation13 + $0x9]]
    %v1501 = vstv %s1500
    %v1502 = vmul.f32 %v1450, %v1501
    %v1503 = vmul.f32 %v1451, %v1501
    %v1504 = vadd.f32 %v1498, %v1502
    %v1505 = vadd.f32 %v1499, %v1503
    %s1506 = sld [smem:[#allocation13 + $0xd]]
    %v1507 = vstv %s1506
    %v1508 = vmul.f32 %v1456, %v1507
    %v1509 = vmul.f32 %v1457, %v1507
    %v1510 = vadd.f32 %v1504, %v1508
    %v1511 = vadd.f32 %v1505, %v1509
    %s1512 = sld [smem:[#allocation14 + $0x1]]
    %v1513 = vstv %s1512
    %v1514 = vadd.f32 %v1510, %v1513
    %v1515 = vadd.f32 %v1511, %v1513
    %v1516 = vadd.f32 %v1514, %v137
    %v1517 = vadd.f32 %v1515, %v138
    %v1518 = vmax.f32 %v1516, 0.0
    %v1519 = vmax.f32 %v1517, 0.0
    %s1520 = scalar_lea.vmem [#allocation18], 16
    %1521 = vst [vmem:[%s1520] sm:$0xff] %v1518
    %1522 = vst [vmem:[%s1520 + $0x8] sm:$0xff] %v1519
    %s1523 = sld [smem:[#allocation13 + $0x2]]
    %v1524 = vstv %s1523
    %v1525 = vmul.f32 %v1438, %v1524
    %v1526 = vmul.f32 %v1439, %v1524
    %s1527 = sld [smem:[#allocation13 + $0x6]]
    %v1528 = vstv %s1527
    %v1529 = vmul.f32 %v1444, %v1528
    %v1530 = vmul.f32 %v1445, %v1528
    %v1531 = vadd.f32 %v1525, %v1529
    %v1532 = vadd.f32 %v1526, %v1530
    %s1533 = sld [smem:[#allocation13 + $0xa]]
    %v1534 = vstv %s1533
    %v1535 = vmul.f32 %v1450, %v1534
    %v1536 = vmul.f32 %v1451, %v1534
    %v1537 = vadd.f32 %v1531, %v1535
    %v1538 = vadd.f32 %v1532, %v1536
    %s1539 = sld [smem:[#allocation13 + $0xe]]
    %v1540 = vstv %s1539
    %v1541 = vmul.f32 %v1456, %v1540
    %v1542 = vmul.f32 %v1457, %v1540
    %v1543 = vadd.f32 %v1537, %v1541
    %v1544 = vadd.f32 %v1538, %v1542
    %s1545 = sld [smem:[#allocation14 + $0x2]]
    %v1546 = vstv %s1545
    %v1547 = vadd.f32 %v1543, %v1546
    %v1548 = vadd.f32 %v1544, %v1546
    %v1549 = vadd.f32 %v1547, %v140
    %v1550 = vadd.f32 %v1548, %v141
    %v1551 = vmax.f32 %v1549, 0.0
    %v1552 = vmax.f32 %v1550, 0.0
    %s1553 = scalar_lea.vmem [#allocation18], 32
    %1554 = vst [vmem:[%s1553] sm:$0xff] %v1551
    %1555 = vst [vmem:[%s1553 + $0x8] sm:$0xff] %v1552
    %s1556 = sld [smem:[#allocation13 + $0x3]]
    %v1557 = vstv %s1556
    %v1558 = vmul.f32 %v1438, %v1557
    %v1559 = vmul.f32 %v1439, %v1557
    %s1560 = sld [smem:[#allocation13 + $0x7]]
    %v1561 = vstv %s1560
    %v1562 = vmul.f32 %v1444, %v1561
    %v1563 = vmul.f32 %v1445, %v1561
    %v1564 = vadd.f32 %v1558, %v1562
    %v1565 = vadd.f32 %v1559, %v1563
    %s1566 = sld [smem:[#allocation13 + $0xb]]
    %v1567 = vstv %s1566
    %v1568 = vmul.f32 %v1450, %v1567
    %v1569 = vmul.f32 %v1451, %v1567
    %v1570 = vadd.f32 %v1564, %v1568
    %v1571 = vadd.f32 %v1565, %v1569
    %s1572 = sld [smem:[#allocation13 + $0xf]]
    %v1573 = vstv %s1572
    %v1574 = vmul.f32 %v1456, %v1573
    %v1575 = vmul.f32 %v1457, %v1573
    %v1576 = vadd.f32 %v1570, %v1574
    %v1577 = vadd.f32 %v1571, %v1575
    %s1578 = sld [smem:[#allocation14 + $0x3]]
    %v1579 = vstv %s1578
    %v1580 = vadd.f32 %v1576, %v1579
    %v1581 = vadd.f32 %v1577, %v1579
    %v1582 = vadd.f32 %v1580, %v143
    %v1583 = vadd.f32 %v1581, %v144
    %v1584 = vmax.f32 %v1582, 0.0
    %v1585 = vmax.f32 %v1583, 0.0
    %s1586 = scalar_lea.vmem [#allocation18], 48
    %1587 = vst [vmem:[%s1586] sm:$0xff] %v1584
    %1588 = vst [vmem:[%s1586 + $0x8] sm:$0xff] %v1585
    // Predicated region
    $region66: #{tpu_custom_call.1} parent=1 // pred_check
      _
    $region67: #{tpu_custom_call.1} parent=1 // pred_check_branch
      %1590 = sbr.rel (0) target = $region69
    $region68: #{tpu_custom_call.1} parent=1 // pred_region
      %1592 = vsyncadd [#allocation4], 0
      %s1593 = sshll.u32 [#allocation18], 4
      %s1594 = int_to_ptr.vmem [resolvable:$true] %s1593
      %s1595 = sshll.u32 %s8, 4
      %s1596 = int_to_ptr.hbm [resolvable:$true] %s1595
      %1601 = dma.vmem_to_hbm [thread:$0]  %s1594, 1024, %s1596, [#allocation4], 256, 256, 16
    $region69: #{tpu_custom_call.1} parent=1 // pred_fallthru
      _
    // Predicated region
    $region70: #{tpu_custom_call.1} parent=1 // pred_check
      _
    $region71: #{tpu_custom_call.1} parent=1 // pred_check_branch
      %1603 = sbr.rel (0) target = $region73
    $region72: #{tpu_custom_call.1} parent=1 // pred_region
      %1605 = dma.done [#allocation4], 1024
    $region73: #{tpu_custom_call.1} parent=1 // pred_fallthru
      _
    %1606 = vsyncpa [#allocation3], 1
    %1607 = vsyncpa [#allocation17], 1
    %1608 = vsyncpa [#allocation4], 1
    %1609 = vsyncpa [#allocation5], 1
    %1610 = vsyncpa [#allocation9], 1
    %1611 = vsyncpa [#allocation6], 1
    %1612 = vsyncpa [#allocation12], 1
    %1613 = vsyncpa [#allocation15], 1

</llo_original>
